<compile_context>
chip_gen: v6e
topology: v6e:2x2x1
jax: 0.10.0
libtpu: 0.0.40
codegen_flags: <defaults>
</compile_context>

<pallas_src>
import functools

import jax
import jax.numpy as jnp
import numpy as np
from jax import lax
from jax.experimental import pallas as pl
from jax.experimental.pallas import tpu as pltpu


# ------------------------------- wrapper ----------------------------------- #
def spatial_attention_forward(x, w, kernel_size=7):
    """x: (N, C, H, W) f32, w: (1, 2, K, K) f32 (PyTorch OIHW, bias=False)."""
    N, C, H, W = x.shape
    K = kernel_size
    PAD = K // 2
    HW = H * W

    # left/right lane padding for the flattened (row-major) spatial axis.
    # a spatial shift (sy, sx) becomes a flat lane shift sy*W + sx; we need
    # PAD*W + PAD lanes of zeros on each side, rounded up to 128 so that the
    # padded value is built from lane-aligned concatenates.
    pad_req = PAD * W + PAD
    PADL = ((pad_req + 127) // 128) * 128

    x_flat = x.reshape(N, C, HW).astype(jnp.float32)          # (N, C, HW)
    w_flat = w.reshape(2 * K * K).astype(jnp.float32)          # w[0,c,dy,dx] -> c*K*K+dy*K+dx

    # 0/1 column-validity masks for the K horizontal taps, hoisted to the host
    # (kills the horizontal wrap across flattened row boundaries).
    cols = np.arange(HW, dtype=np.int64) % W
    cmask_np = np.stack(
        [((cols + (dx - PAD) >= 0) & (cols + (dx - PAD) < W)).astype(np.float32)
         for dx in range(K)], axis=0)                          # (K, HW)
    cmask = jnp.asarray(cmask_np)

    def kernel(x_ref, w_ref, cmask_ref, o_ref):
        xb = x_ref[0]                                          # (C, HW) lane-dense

        # channel mean / max (sublane reductions, XLU)
        mean = jnp.mean(xb, axis=0, keepdims=True)             # (1, HW)
        mx = jnp.max(xb, axis=0, keepdims=True)                # (1, HW)
        maps = jnp.concatenate([mean, mx], axis=0)             # (2, HW)

        # zero-pad the flattened maps along lanes (aligned concat, pad-only fill)
        zpad = jnp.zeros((2, PADL), jnp.float32)
        padf = jnp.concatenate([zpad, maps, zpad], axis=1)     # (2, PADL+HW+PADL)

        cm_all = cmask_ref[...]                                # (K, HW), loaded once

        # 7x7 conv, 2 in-channels -> 1 out-channel: 2*K*K scalar-weighted
        # lane-shifted taps (static Python unroll, VPU + lane shifts only).
        acc = jnp.zeros((1, HW), jnp.float32)
        for dx in range(K):
            sx = dx - PAD
            m = cm_all[dx:dx + 1, :]                           # (1, HW) column mask
            part = jnp.zeros((1, HW), jnp.float32)
            for c in range(2):
                for dy in range(K):
                    sy = dy - PAD
                    start = PADL + sy * W + sx                 # static lane offset
                    tap = padf[c:c + 1, start:start + HW]      # (1, HW)
                    part = part + w_ref[c * K * K + dy * K + dx] * tap
            acc = acc + m * part

        attn = 1.0 / (1.0 + jnp.exp(-acc))                     # sigmoid (EUP)
        o_ref[0] = (xb * attn).astype(o_ref.dtype)             # lane-dense store

    out = pl.pallas_call(
        kernel,
        out_shape=jax.ShapeDtypeStruct((N, C, HW), jnp.float32),
        grid=(N,),
        in_specs=[
            pl.BlockSpec((1, C, HW), lambda n: (n, 0, 0)),                 # x
            pl.BlockSpec(memory_space=pltpu.MemorySpace.SMEM),             # conv weights (scalars)
            pl.BlockSpec((K, HW), lambda n: (0, 0)),                       # column masks
        ],
        out_specs=pl.BlockSpec((1, C, HW), lambda n: (n, 0, 0)),
        compiler_params=pltpu.CompilerParams(
            dimension_semantics=("parallel",),     # images independent -> shard across cores
            vmem_limit_bytes=32 * 1024 * 1024,
        ),
    )(x_flat, w_flat, cmask)

    return out.reshape(N, C, H, W)


# ------------------------ pure-JAX reference (check) ------------------------ #
def spatial_attention_reference(x, w):
    K = w.shape[-1]
    pad = K // 2
    avg = jnp.mean(x, axis=1, keepdims=True)
    mx = jnp.max(x, axis=1, keepdims=True)
    cat = jnp.concatenate([avg, mx], axis=1)
    conv = lax.conv_general_dilated(
        cat, w, window_strides=(1, 1),
        padding=((pad, pad), (pad, pad)),
        dimension_numbers=("NCHW", "OIHW", "NCHW"),
        precision=lax.Precision.HIGHEST)
    return x * jax.nn.sigmoid(conv)


# ---------------------------------- main ------------------------------------ #
if __name__ == "__main__":
    N, C, H, W = 2, 8, 16, 16
    K = 7                                   # SpatialAttention default kernel_size

    key = jax.random.PRNGKey(0)
    kx, kw = jax.random.split(key)
    x = jax.random.normal(kx, (N, C, H, W), jnp.float32)
    w = 0.2 * jax.random.normal(kw, (1, 2, K, K), jnp.float32)   # Conv2d(2,1,7,bias=False)

    fwd = jax.jit(functools.partial(spatial_attention_forward, kernel_size=K))
    out = jax.block_until_ready(fwd(x, w))
    assert out.shape == (N, C, H, W)

    ref = spatial_attention_reference(x, w)
    np.testing.assert_allclose(np.asarray(out), np.asarray(ref), rtol=1e-3, atol=1e-3)

    print("KERNEL_OK")
</pallas_src>

<mosaic_0001>
module attributes {stable_mosaic.version = 11 : i64} {
  func.func @kernel(%arg0: i32, %arg1: memref<1x8x256xf32, #tpu.memory_space<vmem>>, %arg2: memref<98xf32, #tpu.memory_space<smem>>, %arg3: memref<7x256xf32, #tpu.memory_space<vmem>>, %arg4: memref<1x8x256xf32, #tpu.memory_space<vmem>>) attributes {dimension_semantics = [#tpu.dimension_semantics<parallel>], iteration_bounds = array<i64: 2>, scalar_prefetch = 0 : i64, scratch_operands = 0 : i64, tpu.core_type = #tpu.core_type<tc>, window_params = [{transform_indices = @transform_0, window_bounds = array<i64: 1, 8, 256>}, {transform_indices = @transform_1, window_bounds = array<i64: 98>}, {pipeline_mode = #tpu.pipeline_mode<synchronous>, transform_indices = @transform_2, window_bounds = array<i64: 7, 256>}, {transform_indices = @transform_3, window_bounds = array<i64: 1, 8, 256>}]} {
    %c0 = arith.constant 0 : index
    %c0_0 = arith.constant 0 : index
    %c0_1 = arith.constant 0 : index
    %0 = vector.load %arg1[%c0, %c0_0, %c0_1] : memref<1x8x256xf32, #tpu.memory_space<vmem>>, vector<1x8x256xf32>
    %1 = vector.shape_cast %0 : vector<1x8x256xf32> to vector<8x256xf32>
    %cst = arith.constant dense<0.000000e+00> : vector<256xf32>
    %2 = vector.multi_reduction <add>, %1, %cst [0] : vector<8x256xf32> to vector<256xf32>
    %3 = vector.shape_cast %2 : vector<256xf32> to vector<1x256xf32>
    %cst_2 = arith.constant 8.000000e+00 : f32
    %4 = vector.broadcast %cst_2 : f32 to vector<1x256xf32>
    %5 = arith.divf %3, %4 : vector<1x256xf32>
    %cst_3 = arith.constant dense<0xFF800000> : vector<256xf32>
    %6 = vector.multi_reduction <maximumf>, %1, %cst_3 [0] : vector<8x256xf32> to vector<256xf32>
    %7 = vector.shape_cast %6 : vector<256xf32> to vector<1x256xf32>
    %8 = tpu.concatenate %5, %7 in 0 : vector<1x256xf32>, vector<1x256xf32> -> vector<2x256xf32>
    %cst_4 = arith.constant 0.000000e+00 : f32
    %9 = vector.broadcast %cst_4 : f32 to vector<2x128xf32>
    %10 = tpu.concatenate %9, %8, %9 in 1 : vector<2x128xf32>, vector<2x256xf32>, vector<2x128xf32> -> vector<2x512xf32>
    %c0_5 = arith.constant 0 : index
    %c0_6 = arith.constant 0 : index
    %11 = vector.load %arg3[%c0_5, %c0_6] : memref<7x256xf32, #tpu.memory_space<vmem>>, vector<7x256xf32>
    %cst_7 = arith.constant 0.000000e+00 : f32
    %12 = vector.broadcast %cst_7 : f32 to vector<1x256xf32>
    %13 = vector.extract_strided_slice %11 {offsets = [0, 0], sizes = [1, 256], strides = [1, 1]} : vector<7x256xf32> to vector<1x256xf32>
    %cst_8 = arith.constant 0.000000e+00 : f32
    %14 = vector.broadcast %cst_8 : f32 to vector<1x256xf32>
    %15 = vector.extract_strided_slice %10 {offsets = [0, 77], sizes = [1, 256], strides = [1, 1]} : vector<2x512xf32> to vector<1x256xf32>
    %c0_9 = arith.constant 0 : index
    %16 = memref.load %arg2[%c0_9] : memref<98xf32, #tpu.memory_space<smem>>
    %17 = vector.broadcast %16 : f32 to vector<1x256xf32>
    %18 = arith.mulf %17, %15 : vector<1x256xf32>
    %19 = arith.addf %14, %18 : vector<1x256xf32>
    %20 = vector.extract_strided_slice %10 {offsets = [0, 93], sizes = [1, 256], strides = [1, 1]} : vector<2x512xf32> to vector<1x256xf32>
    %c7 = arith.constant 7 : index
    %21 = memref.load %arg2[%c7] : memref<98xf32, #tpu.memory_space<smem>>
    %22 = vector.broadcast %21 : f32 to vector<1x256xf32>
    %23 = arith.mulf %22, %20 : vector<1x256xf32>
    %24 = arith.addf %19, %23 : vector<1x256xf32>
    %25 = vector.extract_strided_slice %10 {offsets = [0, 109], sizes = [1, 256], strides = [1, 1]} : vector<2x512xf32> to vector<1x256xf32>
    %c14 = arith.constant 14 : index
    %26 = memref.load %arg2[%c14] : memref<98xf32, #tpu.memory_space<smem>>
    %27 = vector.broadcast %26 : f32 to vector<1x256xf32>
    %28 = arith.mulf %27, %25 : vector<1x256xf32>
    %29 = arith.addf %24, %28 : vector<1x256xf32>
    %30 = vector.extract_strided_slice %10 {offsets = [0, 125], sizes = [1, 256], strides = [1, 1]} : vector<2x512xf32> to vector<1x256xf32>
    %c21 = arith.constant 21 : index
    %31 = memref.load %arg2[%c21] : memref<98xf32, #tpu.memory_space<smem>>
    %32 = vector.broadcast %31 : f32 to vector<1x256xf32>
    %33 = arith.mulf %32, %30 : vector<1x256xf32>
    %34 = arith.addf %29, %33 : vector<1x256xf32>
    %35 = vector.extract_strided_slice %10 {offsets = [0, 141], sizes = [1, 256], strides = [1, 1]} : vector<2x512xf32> to vector<1x256xf32>
    %c28 = arith.constant 28 : index
    %36 = memref.load %arg2[%c28] : memref<98xf32, #tpu.memory_space<smem>>
    %37 = vector.broadcast %36 : f32 to vector<1x256xf32>
    %38 = arith.mulf %37, %35 : vector<1x256xf32>
    %39 = arith.addf %34, %38 : vector<1x256xf32>
    %40 = vector.extract_strided_slice %10 {offsets = [0, 157], sizes = [1, 256], strides = [1, 1]} : vector<2x512xf32> to vector<1x256xf32>
    %c35 = arith.constant 35 : index
    %41 = memref.load %arg2[%c35] : memref<98xf32, #tpu.memory_space<smem>>
    %42 = vector.broadcast %41 : f32 to vector<1x256xf32>
    %43 = arith.mulf %42, %40 : vector<1x256xf32>
    %44 = arith.addf %39, %43 : vector<1x256xf32>
    %45 = vector.extract_strided_slice %10 {offsets = [0, 173], sizes = [1, 256], strides = [1, 1]} : vector<2x512xf32> to vector<1x256xf32>
    %c42 = arith.constant 42 : index
    %46 = memref.load %arg2[%c42] : memref<98xf32, #tpu.memory_space<smem>>
    %47 = vector.broadcast %46 : f32 to vector<1x256xf32>
    %48 = arith.mulf %47, %45 : vector<1x256xf32>
    %49 = arith.addf %44, %48 : vector<1x256xf32>
    %50 = vector.extract_strided_slice %10 {offsets = [1, 77], sizes = [1, 256], strides = [1, 1]} : vector<2x512xf32> to vector<1x256xf32>
    %c49 = arith.constant 49 : index
    %51 = memref.load %arg2[%c49] : memref<98xf32, #tpu.memory_space<smem>>
    %52 = vector.broadcast %51 : f32 to vector<1x256xf32>
    %53 = arith.mulf %52, %50 : vector<1x256xf32>
    %54 = arith.addf %49, %53 : vector<1x256xf32>
    %55 = vector.extract_strided_slice %10 {offsets = [1, 93], sizes = [1, 256], strides = [1, 1]} : vector<2x512xf32> to vector<1x256xf32>
    %c56 = arith.constant 56 : index
    %56 = memref.load %arg2[%c56] : memref<98xf32, #tpu.memory_space<smem>>
    %57 = vector.broadcast %56 : f32 to vector<1x256xf32>
    %58 = arith.mulf %57, %55 : vector<1x256xf32>
    %59 = arith.addf %54, %58 : vector<1x256xf32>
    %60 = vector.extract_strided_slice %10 {offsets = [1, 109], sizes = [1, 256], strides = [1, 1]} : vector<2x512xf32> to vector<1x256xf32>
    %c63 = arith.constant 63 : index
    %61 = memref.load %arg2[%c63] : memref<98xf32, #tpu.memory_space<smem>>
    %62 = vector.broadcast %61 : f32 to vector<1x256xf32>
    %63 = arith.mulf %62, %60 : vector<1x256xf32>
    %64 = arith.addf %59, %63 : vector<1x256xf32>
    %65 = vector.extract_strided_slice %10 {offsets = [1, 125], sizes = [1, 256], strides = [1, 1]} : vector<2x512xf32> to vector<1x256xf32>
    %c70 = arith.constant 70 : index
    %66 = memref.load %arg2[%c70] : memref<98xf32, #tpu.memory_space<smem>>
    %67 = vector.broadcast %66 : f32 to vector<1x256xf32>
    %68 = arith.mulf %67, %65 : vector<1x256xf32>
    %69 = arith.addf %64, %68 : vector<1x256xf32>
    %70 = vector.extract_strided_slice %10 {offsets = [1, 141], sizes = [1, 256], strides = [1, 1]} : vector<2x512xf32> to vector<1x256xf32>
    %c77 = arith.constant 77 : index
    %71 = memref.load %arg2[%c77] : memref<98xf32, #tpu.memory_space<smem>>
    %72 = vector.broadcast %71 : f32 to vector<1x256xf32>
    %73 = arith.mulf %72, %70 : vector<1x256xf32>
    %74 = arith.addf %69, %73 : vector<1x256xf32>
    %75 = vector.extract_strided_slice %10 {offsets = [1, 157], sizes = [1, 256], strides = [1, 1]} : vector<2x512xf32> to vector<1x256xf32>
    %c84 = arith.constant 84 : index
    %76 = memref.load %arg2[%c84] : memref<98xf32, #tpu.memory_space<smem>>
    %77 = vector.broadcast %76 : f32 to vector<1x256xf32>
    %78 = arith.mulf %77, %75 : vector<1x256xf32>
    %79 = arith.addf %74, %78 : vector<1x256xf32>
    %80 = vector.extract_strided_slice %10 {offsets = [1, 173], sizes = [1, 256], strides = [1, 1]} : vector<2x512xf32> to vector<1x256xf32>
    %c91 = arith.constant 91 : index
    %81 = memref.load %arg2[%c91] : memref<98xf32, #tpu.memory_space<smem>>
    %82 = vector.broadcast %81 : f32 to vector<1x256xf32>
    %83 = arith.mulf %82, %80 : vector<1x256xf32>
    %84 = arith.addf %79, %83 : vector<1x256xf32>
    %85 = arith.mulf %13, %84 : vector<1x256xf32>
    %86 = arith.addf %12, %85 : vector<1x256xf32>
    %87 = vector.extract_strided_slice %11 {offsets = [1, 0], sizes = [1, 256], strides = [1, 1]} : vector<7x256xf32> to vector<1x256xf32>
    %cst_10 = arith.constant 0.000000e+00 : f32
    %88 = vector.broadcast %cst_10 : f32 to vector<1x256xf32>
    %89 = vector.extract_strided_slice %10 {offsets = [0, 78], sizes = [1, 256], strides = [1, 1]} : vector<2x512xf32> to vector<1x256xf32>
    %c1 = arith.constant 1 : index
    %90 = memref.load %arg2[%c1] : memref<98xf32, #tpu.memory_space<smem>>
    %91 = vector.broadcast %90 : f32 to vector<1x256xf32>
    %92 = arith.mulf %91, %89 : vector<1x256xf32>
    %93 = arith.addf %88, %92 : vector<1x256xf32>
    %94 = vector.extract_strided_slice %10 {offsets = [0, 94], sizes = [1, 256], strides = [1, 1]} : vector<2x512xf32> to vector<1x256xf32>
    %c8 = arith.constant 8 : index
    %95 = memref.load %arg2[%c8] : memref<98xf32, #tpu.memory_space<smem>>
    %96 = vector.broadcast %95 : f32 to vector<1x256xf32>
    %97 = arith.mulf %96, %94 : vector<1x256xf32>
    %98 = arith.addf %93, %97 : vector<1x256xf32>
    %99 = vector.extract_strided_slice %10 {offsets = [0, 110], sizes = [1, 256], strides = [1, 1]} : vector<2x512xf32> to vector<1x256xf32>
    %c15 = arith.constant 15 : index
    %100 = memref.load %arg2[%c15] : memref<98xf32, #tpu.memory_space<smem>>
    %101 = vector.broadcast %100 : f32 to vector<1x256xf32>
    %102 = arith.mulf %101, %99 : vector<1x256xf32>
    %103 = arith.addf %98, %102 : vector<1x256xf32>
    %104 = vector.extract_strided_slice %10 {offsets = [0, 126], sizes = [1, 256], strides = [1, 1]} : vector<2x512xf32> to vector<1x256xf32>
    %c22 = arith.constant 22 : index
    %105 = memref.load %arg2[%c22] : memref<98xf32, #tpu.memory_space<smem>>
    %106 = vector.broadcast %105 : f32 to vector<1x256xf32>
    %107 = arith.mulf %106, %104 : vector<1x256xf32>
    %108 = arith.addf %103, %107 : vector<1x256xf32>
    %109 = vector.extract_strided_slice %10 {offsets = [0, 142], sizes = [1, 256], strides = [1, 1]} : vector<2x512xf32> to vector<1x256xf32>
    %c29 = arith.constant 29 : index
    %110 = memref.load %arg2[%c29] : memref<98xf32, #tpu.memory_space<smem>>
    %111 = vector.broadcast %110 : f32 to vector<1x256xf32>
    %112 = arith.mulf %111, %109 : vector<1x256xf32>
    %113 = arith.addf %108, %112 : vector<1x256xf32>
    %114 = vector.extract_strided_slice %10 {offsets = [0, 158], sizes = [1, 256], strides = [1, 1]} : vector<2x512xf32> to vector<1x256xf32>
    %c36 = arith.constant 36 : index
    %115 = memref.load %arg2[%c36] : memref<98xf32, #tpu.memory_space<smem>>
    %116 = vector.broadcast %115 : f32 to vector<1x256xf32>
    %117 = arith.mulf %116, %114 : vector<1x256xf32>
    %118 = arith.addf %113, %117 : vector<1x256xf32>
    %119 = vector.extract_strided_slice %10 {offsets = [0, 174], sizes = [1, 256], strides = [1, 1]} : vector<2x512xf32> to vector<1x256xf32>
    %c43 = arith.constant 43 : index
    %120 = memref.load %arg2[%c43] : memref<98xf32, #tpu.memory_space<smem>>
    %121 = vector.broadcast %120 : f32 to vector<1x256xf32>
    %122 = arith.mulf %121, %119 : vector<1x256xf32>
    %123 = arith.addf %118, %122 : vector<1x256xf32>
    %124 = vector.extract_strided_slice %10 {offsets = [1, 78], sizes = [1, 256], strides = [1, 1]} : vector<2x512xf32> to vector<1x256xf32>
    %c50 = arith.constant 50 : index
    %125 = memref.load %arg2[%c50] : memref<98xf32, #tpu.memory_space<smem>>
    %126 = vector.broadcast %125 : f32 to vector<1x256xf32>
    %127 = arith.mulf %126, %124 : vector<1x256xf32>
    %128 = arith.addf %123, %127 : vector<1x256xf32>
    %129 = vector.extract_strided_slice %10 {offsets = [1, 94], sizes = [1, 256], strides = [1, 1]} : vector<2x512xf32> to vector<1x256xf32>
    %c57 = arith.constant 57 : index
    %130 = memref.load %arg2[%c57] : memref<98xf32, #tpu.memory_space<smem>>
    %131 = vector.broadcast %130 : f32 to vector<1x256xf32>
    %132 = arith.mulf %131, %129 : vector<1x256xf32>
    %133 = arith.addf %128, %132 : vector<1x256xf32>
    %134 = vector.extract_strided_slice %10 {offsets = [1, 110], sizes = [1, 256], strides = [1, 1]} : vector<2x512xf32> to vector<1x256xf32>
    %c64 = arith.constant 64 : index
    %135 = memref.load %arg2[%c64] : memref<98xf32, #tpu.memory_space<smem>>
    %136 = vector.broadcast %135 : f32 to vector<1x256xf32>
    %137 = arith.mulf %136, %134 : vector<1x256xf32>
    %138 = arith.addf %133, %137 : vector<1x256xf32>
    %139 = vector.extract_strided_slice %10 {offsets = [1, 126], sizes = [1, 256], strides = [1, 1]} : vector<2x512xf32> to vector<1x256xf32>
    %c71 = arith.constant 71 : index
    %140 = memref.load %arg2[%c71] : memref<98xf32, #tpu.memory_space<smem>>
    %141 = vector.broadcast %140 : f32 to vector<1x256xf32>
    %142 = arith.mulf %141, %139 : vector<1x256xf32>
    %143 = arith.addf %138, %142 : vector<1x256xf32>
    %144 = vector.extract_strided_slice %10 {offsets = [1, 142], sizes = [1, 256], strides = [1, 1]} : vector<2x512xf32> to vector<1x256xf32>
    %c78 = arith.constant 78 : index
    %145 = memref.load %arg2[%c78] : memref<98xf32, #tpu.memory_space<smem>>
    %146 = vector.broadcast %145 : f32 to vector<1x256xf32>
    %147 = arith.mulf %146, %144 : vector<1x256xf32>
    %148 = arith.addf %143, %147 : vector<1x256xf32>
    %149 = vector.extract_strided_slice %10 {offsets = [1, 158], sizes = [1, 256], strides = [1, 1]} : vector<2x512xf32> to vector<1x256xf32>
    %c85 = arith.constant 85 : index
    %150 = memref.load %arg2[%c85] : memref<98xf32, #tpu.memory_space<smem>>
    %151 = vector.broadcast %150 : f32 to vector<1x256xf32>
    %152 = arith.mulf %151, %149 : vector<1x256xf32>
    %153 = arith.addf %148, %152 : vector<1x256xf32>
    %154 = vector.extract_strided_slice %10 {offsets = [1, 174], sizes = [1, 256], strides = [1, 1]} : vector<2x512xf32> to vector<1x256xf32>
    %c92 = arith.constant 92 : index
    %155 = memref.load %arg2[%c92] : memref<98xf32, #tpu.memory_space<smem>>
    %156 = vector.broadcast %155 : f32 to vector<1x256xf32>
    %157 = arith.mulf %156, %154 : vector<1x256xf32>
    %158 = arith.addf %153, %157 : vector<1x256xf32>
    %159 = arith.mulf %87, %158 : vector<1x256xf32>
    %160 = arith.addf %86, %159 : vector<1x256xf32>
    %161 = vector.extract_strided_slice %11 {offsets = [2, 0], sizes = [1, 256], strides = [1, 1]} : vector<7x256xf32> to vector<1x256xf32>
    %cst_11 = arith.constant 0.000000e+00 : f32
    %162 = vector.broadcast %cst_11 : f32 to vector<1x256xf32>
    %163 = vector.extract_strided_slice %10 {offsets = [0, 79], sizes = [1, 256], strides = [1, 1]} : vector<2x512xf32> to vector<1x256xf32>
    %c2 = arith.constant 2 : index
    %164 = memref.load %arg2[%c2] : memref<98xf32, #tpu.memory_space<smem>>
    %165 = vector.broadcast %164 : f32 to vector<1x256xf32>
    %166 = arith.mulf %165, %163 : vector<1x256xf32>
    %167 = arith.addf %162, %166 : vector<1x256xf32>
    %168 = vector.extract_strided_slice %10 {offsets = [0, 95], sizes = [1, 256], strides = [1, 1]} : vector<2x512xf32> to vector<1x256xf32>
    %c9 = arith.constant 9 : index
    %169 = memref.load %arg2[%c9] : memref<98xf32, #tpu.memory_space<smem>>
    %170 = vector.broadcast %169 : f32 to vector<1x256xf32>
    %171 = arith.mulf %170, %168 : vector<1x256xf32>
    %172 = arith.addf %167, %171 : vector<1x256xf32>
    %173 = vector.extract_strided_slice %10 {offsets = [0, 111], sizes = [1, 256], strides = [1, 1]} : vector<2x512xf32> to vector<1x256xf32>
    %c16 = arith.constant 16 : index
    %174 = memref.load %arg2[%c16] : memref<98xf32, #tpu.memory_space<smem>>
    %175 = vector.broadcast %174 : f32 to vector<1x256xf32>
    %176 = arith.mulf %175, %173 : vector<1x256xf32>
    %177 = arith.addf %172, %176 : vector<1x256xf32>
    %178 = vector.extract_strided_slice %10 {offsets = [0, 127], sizes = [1, 256], strides = [1, 1]} : vector<2x512xf32> to vector<1x256xf32>
    %c23 = arith.constant 23 : index
    %179 = memref.load %arg2[%c23] : memref<98xf32, #tpu.memory_space<smem>>
    %180 = vector.broadcast %179 : f32 to vector<1x256xf32>
    %181 = arith.mulf %180, %178 : vector<1x256xf32>
    %182 = arith.addf %177, %181 : vector<1x256xf32>
    %183 = vector.extract_strided_slice %10 {offsets = [0, 143], sizes = [1, 256], strides = [1, 1]} : vector<2x512xf32> to vector<1x256xf32>
    %c30 = arith.constant 30 : index
    %184 = memref.load %arg2[%c30] : memref<98xf32, #tpu.memory_space<smem>>
    %185 = vector.broadcast %184 : f32 to vector<1x256xf32>
    %186 = arith.mulf %185, %183 : vector<1x256xf32>
    %187 = arith.addf %182, %186 : vector<1x256xf32>
    %188 = vector.extract_strided_slice %10 {offsets = [0, 159], sizes = [1, 256], strides = [1, 1]} : vector<2x512xf32> to vector<1x256xf32>
    %c37 = arith.constant 37 : index
    %189 = memref.load %arg2[%c37] : memref<98xf32, #tpu.memory_space<smem>>
    %190 = vector.broadcast %189 : f32 to vector<1x256xf32>
    %191 = arith.mulf %190, %188 : vector<1x256xf32>
    %192 = arith.addf %187, %191 : vector<1x256xf32>
    %193 = vector.extract_strided_slice %10 {offsets = [0, 175], sizes = [1, 256], strides = [1, 1]} : vector<2x512xf32> to vector<1x256xf32>
    %c44 = arith.constant 44 : index
    %194 = memref.load %arg2[%c44] : memref<98xf32, #tpu.memory_space<smem>>
    %195 = vector.broadcast %194 : f32 to vector<1x256xf32>
    %196 = arith.mulf %195, %193 : vector<1x256xf32>
    %197 = arith.addf %192, %196 : vector<1x256xf32>
    %198 = vector.extract_strided_slice %10 {offsets = [1, 79], sizes = [1, 256], strides = [1, 1]} : vector<2x512xf32> to vector<1x256xf32>
    %c51 = arith.constant 51 : index
    %199 = memref.load %arg2[%c51] : memref<98xf32, #tpu.memory_space<smem>>
    %200 = vector.broadcast %199 : f32 to vector<1x256xf32>
    %201 = arith.mulf %200, %198 : vector<1x256xf32>
    %202 = arith.addf %197, %201 : vector<1x256xf32>
    %203 = vector.extract_strided_slice %10 {offsets = [1, 95], sizes = [1, 256], strides = [1, 1]} : vector<2x512xf32> to vector<1x256xf32>
    %c58 = arith.constant 58 : index
    %204 = memref.load %arg2[%c58] : memref<98xf32, #tpu.memory_space<smem>>
    %205 = vector.broadcast %204 : f32 to vector<1x256xf32>
    %206 = arith.mulf %205, %203 : vector<1x256xf32>
    %207 = arith.addf %202, %206 : vector<1x256xf32>
    %208 = vector.extract_strided_slice %10 {offsets = [1, 111], sizes = [1, 256], strides = [1, 1]} : vector<2x512xf32> to vector<1x256xf32>
    %c65 = arith.constant 65 : index
    %209 = memref.load %arg2[%c65] : memref<98xf32, #tpu.memory_space<smem>>
    %210 = vector.broadcast %209 : f32 to vector<1x256xf32>
    %211 = arith.mulf %210, %208 : vector<1x256xf32>
    %212 = arith.addf %207, %211 : vector<1x256xf32>
    %213 = vector.extract_strided_slice %10 {offsets = [1, 127], sizes = [1, 256], strides = [1, 1]} : vector<2x512xf32> to vector<1x256xf32>
    %c72 = arith.constant 72 : index
    %214 = memref.load %arg2[%c72] : memref<98xf32, #tpu.memory_space<smem>>
    %215 = vector.broadcast %214 : f32 to vector<1x256xf32>
    %216 = arith.mulf %215, %213 : vector<1x256xf32>
    %217 = arith.addf %212, %216 : vector<1x256xf32>
    %218 = vector.extract_strided_slice %10 {offsets = [1, 143], sizes = [1, 256], strides = [1, 1]} : vector<2x512xf32> to vector<1x256xf32>
    %c79 = arith.constant 79 : index
    %219 = memref.load %arg2[%c79] : memref<98xf32, #tpu.memory_space<smem>>
    %220 = vector.broadcast %219 : f32 to vector<1x256xf32>
    %221 = arith.mulf %220, %218 : vector<1x256xf32>
    %222 = arith.addf %217, %221 : vector<1x256xf32>
    %223 = vector.extract_strided_slice %10 {offsets = [1, 159], sizes = [1, 256], strides = [1, 1]} : vector<2x512xf32> to vector<1x256xf32>
    %c86 = arith.constant 86 : index
    %224 = memref.load %arg2[%c86] : memref<98xf32, #tpu.memory_space<smem>>
    %225 = vector.broadcast %224 : f32 to vector<1x256xf32>
    %226 = arith.mulf %225, %223 : vector<1x256xf32>
    %227 = arith.addf %222, %226 : vector<1x256xf32>
    %228 = vector.extract_strided_slice %10 {offsets = [1, 175], sizes = [1, 256], strides = [1, 1]} : vector<2x512xf32> to vector<1x256xf32>
    %c93 = arith.constant 93 : index
    %229 = memref.load %arg2[%c93] : memref<98xf32, #tpu.memory_space<smem>>
    %230 = vector.broadcast %229 : f32 to vector<1x256xf32>
    %231 = arith.mulf %230, %228 : vector<1x256xf32>
    %232 = arith.addf %227, %231 : vector<1x256xf32>
    %233 = arith.mulf %161, %232 : vector<1x256xf32>
    %234 = arith.addf %160, %233 : vector<1x256xf32>
    %235 = vector.extract_strided_slice %11 {offsets = [3, 0], sizes = [1, 256], strides = [1, 1]} : vector<7x256xf32> to vector<1x256xf32>
    %cst_12 = arith.constant 0.000000e+00 : f32
    %236 = vector.broadcast %cst_12 : f32 to vector<1x256xf32>
    %237 = vector.extract_strided_slice %10 {offsets = [0, 80], sizes = [1, 256], strides = [1, 1]} : vector<2x512xf32> to vector<1x256xf32>
    %c3 = arith.constant 3 : index
    %238 = memref.load %arg2[%c3] : memref<98xf32, #tpu.memory_space<smem>>
    %239 = vector.broadcast %238 : f32 to vector<1x256xf32>
    %240 = arith.mulf %239, %237 : vector<1x256xf32>
    %241 = arith.addf %236, %240 : vector<1x256xf32>
    %242 = vector.extract_strided_slice %10 {offsets = [0, 96], sizes = [1, 256], strides = [1, 1]} : vector<2x512xf32> to vector<1x256xf32>
    %c10 = arith.constant 10 : index
    %243 = memref.load %arg2[%c10] : memref<98xf32, #tpu.memory_space<smem>>
    %244 = vector.broadcast %243 : f32 to vector<1x256xf32>
    %245 = arith.mulf %244, %242 : vector<1x256xf32>
    %246 = arith.addf %241, %245 : vector<1x256xf32>
    %247 = vector.extract_strided_slice %10 {offsets = [0, 112], sizes = [1, 256], strides = [1, 1]} : vector<2x512xf32> to vector<1x256xf32>
    %c17 = arith.constant 17 : index
    %248 = memref.load %arg2[%c17] : memref<98xf32, #tpu.memory_space<smem>>
    %249 = vector.broadcast %248 : f32 to vector<1x256xf32>
    %250 = arith.mulf %249, %247 : vector<1x256xf32>
    %251 = arith.addf %246, %250 : vector<1x256xf32>
    %252 = vector.extract_strided_slice %10 {offsets = [0, 128], sizes = [1, 256], strides = [1, 1]} : vector<2x512xf32> to vector<1x256xf32>
    %c24 = arith.constant 24 : index
    %253 = memref.load %arg2[%c24] : memref<98xf32, #tpu.memory_space<smem>>
    %254 = vector.broadcast %253 : f32 to vector<1x256xf32>
    %255 = arith.mulf %254, %252 : vector<1x256xf32>
    %256 = arith.addf %251, %255 : vector<1x256xf32>
    %257 = vector.extract_strided_slice %10 {offsets = [0, 144], sizes = [1, 256], strides = [1, 1]} : vector<2x512xf32> to vector<1x256xf32>
    %c31 = arith.constant 31 : index
    %258 = memref.load %arg2[%c31] : memref<98xf32, #tpu.memory_space<smem>>
    %259 = vector.broadcast %258 : f32 to vector<1x256xf32>
    %260 = arith.mulf %259, %257 : vector<1x256xf32>
    %261 = arith.addf %256, %260 : vector<1x256xf32>
    %262 = vector.extract_strided_slice %10 {offsets = [0, 160], sizes = [1, 256], strides = [1, 1]} : vector<2x512xf32> to vector<1x256xf32>
    %c38 = arith.constant 38 : index
    %263 = memref.load %arg2[%c38] : memref<98xf32, #tpu.memory_space<smem>>
    %264 = vector.broadcast %263 : f32 to vector<1x256xf32>
    %265 = arith.mulf %264, %262 : vector<1x256xf32>
    %266 = arith.addf %261, %265 : vector<1x256xf32>
    %267 = vector.extract_strided_slice %10 {offsets = [0, 176], sizes = [1, 256], strides = [1, 1]} : vector<2x512xf32> to vector<1x256xf32>
    %c45 = arith.constant 45 : index
    %268 = memref.load %arg2[%c45] : memref<98xf32, #tpu.memory_space<smem>>
    %269 = vector.broadcast %268 : f32 to vector<1x256xf32>
    %270 = arith.mulf %269, %267 : vector<1x256xf32>
    %271 = arith.addf %266, %270 : vector<1x256xf32>
    %272 = vector.extract_strided_slice %10 {offsets = [1, 80], sizes = [1, 256], strides = [1, 1]} : vector<2x512xf32> to vector<1x256xf32>
    %c52 = arith.constant 52 : index
    %273 = memref.load %arg2[%c52] : memref<98xf32, #tpu.memory_space<smem>>
    %274 = vector.broadcast %273 : f32 to vector<1x256xf32>
    %275 = arith.mulf %274, %272 : vector<1x256xf32>
    %276 = arith.addf %271, %275 : vector<1x256xf32>
    %277 = vector.extract_strided_slice %10 {offsets = [1, 96], sizes = [1, 256], strides = [1, 1]} : vector<2x512xf32> to vector<1x256xf32>
    %c59 = arith.constant 59 : index
    %278 = memref.load %arg2[%c59] : memref<98xf32, #tpu.memory_space<smem>>
    %279 = vector.broadcast %278 : f32 to vector<1x256xf32>
    %280 = arith.mulf %279, %277 : vector<1x256xf32>
    %281 = arith.addf %276, %280 : vector<1x256xf32>
    %282 = vector.extract_strided_slice %10 {offsets = [1, 112], sizes = [1, 256], strides = [1, 1]} : vector<2x512xf32> to vector<1x256xf32>
    %c66 = arith.constant 66 : index
    %283 = memref.load %arg2[%c66] : memref<98xf32, #tpu.memory_space<smem>>
    %284 = vector.broadcast %283 : f32 to vector<1x256xf32>
    %285 = arith.mulf %284, %282 : vector<1x256xf32>
    %286 = arith.addf %281, %285 : vector<1x256xf32>
    %287 = vector.extract_strided_slice %10 {offsets = [1, 128], sizes = [1, 256], strides = [1, 1]} : vector<2x512xf32> to vector<1x256xf32>
    %c73 = arith.constant 73 : index
    %288 = memref.load %arg2[%c73] : memref<98xf32, #tpu.memory_space<smem>>
    %289 = vector.broadcast %288 : f32 to vector<1x256xf32>
    %290 = arith.mulf %289, %287 : vector<1x256xf32>
    %291 = arith.addf %286, %290 : vector<1x256xf32>
    %292 = vector.extract_strided_slice %10 {offsets = [1, 144], sizes = [1, 256], strides = [1, 1]} : vector<2x512xf32> to vector<1x256xf32>
    %c80 = arith.constant 80 : index
    %293 = memref.load %arg2[%c80] : memref<98xf32, #tpu.memory_space<smem>>
    %294 = vector.broadcast %293 : f32 to vector<1x256xf32>
    %295 = arith.mulf %294, %292 : vector<1x256xf32>
    %296 = arith.addf %291, %295 : vector<1x256xf32>
    %297 = vector.extract_strided_slice %10 {offsets = [1, 160], sizes = [1, 256], strides = [1, 1]} : vector<2x512xf32> to vector<1x256xf32>
    %c87 = arith.constant 87 : index
    %298 = memref.load %arg2[%c87] : memref<98xf32, #tpu.memory_space<smem>>
    %299 = vector.broadcast %298 : f32 to vector<1x256xf32>
    %300 = arith.mulf %299, %297 : vector<1x256xf32>
    %301 = arith.addf %296, %300 : vector<1x256xf32>
    %302 = vector.extract_strided_slice %10 {offsets = [1, 176], sizes = [1, 256], strides = [1, 1]} : vector<2x512xf32> to vector<1x256xf32>
    %c94 = arith.constant 94 : index
    %303 = memref.load %arg2[%c94] : memref<98xf32, #tpu.memory_space<smem>>
    %304 = vector.broadcast %303 : f32 to vector<1x256xf32>
    %305 = arith.mulf %304, %302 : vector<1x256xf32>
    %306 = arith.addf %301, %305 : vector<1x256xf32>
    %307 = arith.mulf %235, %306 : vector<1x256xf32>
    %308 = arith.addf %234, %307 : vector<1x256xf32>
    %309 = vector.extract_strided_slice %11 {offsets = [4, 0], sizes = [1, 256], strides = [1, 1]} : vector<7x256xf32> to vector<1x256xf32>
    %cst_13 = arith.constant 0.000000e+00 : f32
    %310 = vector.broadcast %cst_13 : f32 to vector<1x256xf32>
    %311 = vector.extract_strided_slice %10 {offsets = [0, 81], sizes = [1, 256], strides = [1, 1]} : vector<2x512xf32> to vector<1x256xf32>
    %c4 = arith.constant 4 : index
    %312 = memref.load %arg2[%c4] : memref<98xf32, #tpu.memory_space<smem>>
    %313 = vector.broadcast %312 : f32 to vector<1x256xf32>
    %314 = arith.mulf %313, %311 : vector<1x256xf32>
    %315 = arith.addf %310, %314 : vector<1x256xf32>
    %316 = vector.extract_strided_slice %10 {offsets = [0, 97], sizes = [1, 256], strides = [1, 1]} : vector<2x512xf32> to vector<1x256xf32>
    %c11 = arith.constant 11 : index
    %317 = memref.load %arg2[%c11] : memref<98xf32, #tpu.memory_space<smem>>
    %318 = vector.broadcast %317 : f32 to vector<1x256xf32>
    %319 = arith.mulf %318, %316 : vector<1x256xf32>
    %320 = arith.addf %315, %319 : vector<1x256xf32>
    %321 = vector.extract_strided_slice %10 {offsets = [0, 113], sizes = [1, 256], strides = [1, 1]} : vector<2x512xf32> to vector<1x256xf32>
    %c18 = arith.constant 18 : index
    %322 = memref.load %arg2[%c18] : memref<98xf32, #tpu.memory_space<smem>>
    %323 = vector.broadcast %322 : f32 to vector<1x256xf32>
    %324 = arith.mulf %323, %321 : vector<1x256xf32>
    %325 = arith.addf %320, %324 : vector<1x256xf32>
    %326 = vector.extract_strided_slice %10 {offsets = [0, 129], sizes = [1, 256], strides = [1, 1]} : vector<2x512xf32> to vector<1x256xf32>
    %c25 = arith.constant 25 : index
    %327 = memref.load %arg2[%c25] : memref<98xf32, #tpu.memory_space<smem>>
    %328 = vector.broadcast %327 : f32 to vector<1x256xf32>
    %329 = arith.mulf %328, %326 : vector<1x256xf32>
    %330 = arith.addf %325, %329 : vector<1x256xf32>
    %331 = vector.extract_strided_slice %10 {offsets = [0, 145], sizes = [1, 256], strides = [1, 1]} : vector<2x512xf32> to vector<1x256xf32>
    %c32 = arith.constant 32 : index
    %332 = memref.load %arg2[%c32] : memref<98xf32, #tpu.memory_space<smem>>
    %333 = vector.broadcast %332 : f32 to vector<1x256xf32>
    %334 = arith.mulf %333, %331 : vector<1x256xf32>
    %335 = arith.addf %330, %334 : vector<1x256xf32>
    %336 = vector.extract_strided_slice %10 {offsets = [0, 161], sizes = [1, 256], strides = [1, 1]} : vector<2x512xf32> to vector<1x256xf32>
    %c39 = arith.constant 39 : index
    %337 = memref.load %arg2[%c39] : memref<98xf32, #tpu.memory_space<smem>>
    %338 = vector.broadcast %337 : f32 to vector<1x256xf32>
    %339 = arith.mulf %338, %336 : vector<1x256xf32>
    %340 = arith.addf %335, %339 : vector<1x256xf32>
    %341 = vector.extract_strided_slice %10 {offsets = [0, 177], sizes = [1, 256], strides = [1, 1]} : vector<2x512xf32> to vector<1x256xf32>
    %c46 = arith.constant 46 : index
    %342 = memref.load %arg2[%c46] : memref<98xf32, #tpu.memory_space<smem>>
    %343 = vector.broadcast %342 : f32 to vector<1x256xf32>
    %344 = arith.mulf %343, %341 : vector<1x256xf32>
    %345 = arith.addf %340, %344 : vector<1x256xf32>
    %346 = vector.extract_strided_slice %10 {offsets = [1, 81], sizes = [1, 256], strides = [1, 1]} : vector<2x512xf32> to vector<1x256xf32>
    %c53 = arith.constant 53 : index
    %347 = memref.load %arg2[%c53] : memref<98xf32, #tpu.memory_space<smem>>
    %348 = vector.broadcast %347 : f32 to vector<1x256xf32>
    %349 = arith.mulf %348, %346 : vector<1x256xf32>
    %350 = arith.addf %345, %349 : vector<1x256xf32>
    %351 = vector.extract_strided_slice %10 {offsets = [1, 97], sizes = [1, 256], strides = [1, 1]} : vector<2x512xf32> to vector<1x256xf32>
    %c60 = arith.constant 60 : index
    %352 = memref.load %arg2[%c60] : memref<98xf32, #tpu.memory_space<smem>>
    %353 = vector.broadcast %352 : f32 to vector<1x256xf32>
    %354 = arith.mulf %353, %351 : vector<1x256xf32>
    %355 = arith.addf %350, %354 : vector<1x256xf32>
    %356 = vector.extract_strided_slice %10 {offsets = [1, 113], sizes = [1, 256], strides = [1, 1]} : vector<2x512xf32> to vector<1x256xf32>
    %c67 = arith.constant 67 : index
    %357 = memref.load %arg2[%c67] : memref<98xf32, #tpu.memory_space<smem>>
    %358 = vector.broadcast %357 : f32 to vector<1x256xf32>
    %359 = arith.mulf %358, %356 : vector<1x256xf32>
    %360 = arith.addf %355, %359 : vector<1x256xf32>
    %361 = vector.extract_strided_slice %10 {offsets = [1, 129], sizes = [1, 256], strides = [1, 1]} : vector<2x512xf32> to vector<1x256xf32>
    %c74 = arith.constant 74 : index
    %362 = memref.load %arg2[%c74] : memref<98xf32, #tpu.memory_space<smem>>
    %363 = vector.broadcast %362 : f32 to vector<1x256xf32>
    %364 = arith.mulf %363, %361 : vector<1x256xf32>
    %365 = arith.addf %360, %364 : vector<1x256xf32>
    %366 = vector.extract_strided_slice %10 {offsets = [1, 145], sizes = [1, 256], strides = [1, 1]} : vector<2x512xf32> to vector<1x256xf32>
    %c81 = arith.constant 81 : index
    %367 = memref.load %arg2[%c81] : memref<98xf32, #tpu.memory_space<smem>>
    %368 = vector.broadcast %367 : f32 to vector<1x256xf32>
    %369 = arith.mulf %368, %366 : vector<1x256xf32>
    %370 = arith.addf %365, %369 : vector<1x256xf32>
    %371 = vector.extract_strided_slice %10 {offsets = [1, 161], sizes = [1, 256], strides = [1, 1]} : vector<2x512xf32> to vector<1x256xf32>
    %c88 = arith.constant 88 : index
    %372 = memref.load %arg2[%c88] : memref<98xf32, #tpu.memory_space<smem>>
    %373 = vector.broadcast %372 : f32 to vector<1x256xf32>
    %374 = arith.mulf %373, %371 : vector<1x256xf32>
    %375 = arith.addf %370, %374 : vector<1x256xf32>
    %376 = vector.extract_strided_slice %10 {offsets = [1, 177], sizes = [1, 256], strides = [1, 1]} : vector<2x512xf32> to vector<1x256xf32>
    %c95 = arith.constant 95 : index
    %377 = memref.load %arg2[%c95] : memref<98xf32, #tpu.memory_space<smem>>
    %378 = vector.broadcast %377 : f32 to vector<1x256xf32>
    %379 = arith.mulf %378, %376 : vector<1x256xf32>
    %380 = arith.addf %375, %379 : vector<1x256xf32>
    %381 = arith.mulf %309, %380 : vector<1x256xf32>
    %382 = arith.addf %308, %381 : vector<1x256xf32>
    %383 = vector.extract_strided_slice %11 {offsets = [5, 0], sizes = [1, 256], strides = [1, 1]} : vector<7x256xf32> to vector<1x256xf32>
    %cst_14 = arith.constant 0.000000e+00 : f32
    %384 = vector.broadcast %cst_14 : f32 to vector<1x256xf32>
    %385 = vector.extract_strided_slice %10 {offsets = [0, 82], sizes = [1, 256], strides = [1, 1]} : vector<2x512xf32> to vector<1x256xf32>
    %c5 = arith.constant 5 : index
    %386 = memref.load %arg2[%c5] : memref<98xf32, #tpu.memory_space<smem>>
    %387 = vector.broadcast %386 : f32 to vector<1x256xf32>
    %388 = arith.mulf %387, %385 : vector<1x256xf32>
    %389 = arith.addf %384, %388 : vector<1x256xf32>
    %390 = vector.extract_strided_slice %10 {offsets = [0, 98], sizes = [1, 256], strides = [1, 1]} : vector<2x512xf32> to vector<1x256xf32>
    %c12 = arith.constant 12 : index
    %391 = memref.load %arg2[%c12] : memref<98xf32, #tpu.memory_space<smem>>
    %392 = vector.broadcast %391 : f32 to vector<1x256xf32>
    %393 = arith.mulf %392, %390 : vector<1x256xf32>
    %394 = arith.addf %389, %393 : vector<1x256xf32>
    %395 = vector.extract_strided_slice %10 {offsets = [0, 114], sizes = [1, 256], strides = [1, 1]} : vector<2x512xf32> to vector<1x256xf32>
    %c19 = arith.constant 19 : index
    %396 = memref.load %arg2[%c19] : memref<98xf32, #tpu.memory_space<smem>>
    %397 = vector.broadcast %396 : f32 to vector<1x256xf32>
    %398 = arith.mulf %397, %395 : vector<1x256xf32>
    %399 = arith.addf %394, %398 : vector<1x256xf32>
    %400 = vector.extract_strided_slice %10 {offsets = [0, 130], sizes = [1, 256], strides = [1, 1]} : vector<2x512xf32> to vector<1x256xf32>
    %c26 = arith.constant 26 : index
    %401 = memref.load %arg2[%c26] : memref<98xf32, #tpu.memory_space<smem>>
    %402 = vector.broadcast %401 : f32 to vector<1x256xf32>
    %403 = arith.mulf %402, %400 : vector<1x256xf32>
    %404 = arith.addf %399, %403 : vector<1x256xf32>
    %405 = vector.extract_strided_slice %10 {offsets = [0, 146], sizes = [1, 256], strides = [1, 1]} : vector<2x512xf32> to vector<1x256xf32>
    %c33 = arith.constant 33 : index
    %406 = memref.load %arg2[%c33] : memref<98xf32, #tpu.memory_space<smem>>
    %407 = vector.broadcast %406 : f32 to vector<1x256xf32>
    %408 = arith.mulf %407, %405 : vector<1x256xf32>
    %409 = arith.addf %404, %408 : vector<1x256xf32>
    %410 = vector.extract_strided_slice %10 {offsets = [0, 162], sizes = [1, 256], strides = [1, 1]} : vector<2x512xf32> to vector<1x256xf32>
    %c40 = arith.constant 40 : index
    %411 = memref.load %arg2[%c40] : memref<98xf32, #tpu.memory_space<smem>>
    %412 = vector.broadcast %411 : f32 to vector<1x256xf32>
    %413 = arith.mulf %412, %410 : vector<1x256xf32>
    %414 = arith.addf %409, %413 : vector<1x256xf32>
    %415 = vector.extract_strided_slice %10 {offsets = [0, 178], sizes = [1, 256], strides = [1, 1]} : vector<2x512xf32> to vector<1x256xf32>
    %c47 = arith.constant 47 : index
    %416 = memref.load %arg2[%c47] : memref<98xf32, #tpu.memory_space<smem>>
    %417 = vector.broadcast %416 : f32 to vector<1x256xf32>
    %418 = arith.mulf %417, %415 : vector<1x256xf32>
    %419 = arith.addf %414, %418 : vector<1x256xf32>
    %420 = vector.extract_strided_slice %10 {offsets = [1, 82], sizes = [1, 256], strides = [1, 1]} : vector<2x512xf32> to vector<1x256xf32>
    %c54 = arith.constant 54 : index
    %421 = memref.load %arg2[%c54] : memref<98xf32, #tpu.memory_space<smem>>
    %422 = vector.broadcast %421 : f32 to vector<1x256xf32>
    %423 = arith.mulf %422, %420 : vector<1x256xf32>
    %424 = arith.addf %419, %423 : vector<1x256xf32>
    %425 = vector.extract_strided_slice %10 {offsets = [1, 98], sizes = [1, 256], strides = [1, 1]} : vector<2x512xf32> to vector<1x256xf32>
    %c61 = arith.constant 61 : index
    %426 = memref.load %arg2[%c61] : memref<98xf32, #tpu.memory_space<smem>>
    %427 = vector.broadcast %426 : f32 to vector<1x256xf32>
    %428 = arith.mulf %427, %425 : vector<1x256xf32>
    %429 = arith.addf %424, %428 : vector<1x256xf32>
    %430 = vector.extract_strided_slice %10 {offsets = [1, 114], sizes = [1, 256], strides = [1, 1]} : vector<2x512xf32> to vector<1x256xf32>
    %c68 = arith.constant 68 : index
    %431 = memref.load %arg2[%c68] : memref<98xf32, #tpu.memory_space<smem>>
    %432 = vector.broadcast %431 : f32 to vector<1x256xf32>
    %433 = arith.mulf %432, %430 : vector<1x256xf32>
    %434 = arith.addf %429, %433 : vector<1x256xf32>
    %435 = vector.extract_strided_slice %10 {offsets = [1, 130], sizes = [1, 256], strides = [1, 1]} : vector<2x512xf32> to vector<1x256xf32>
    %c75 = arith.constant 75 : index
    %436 = memref.load %arg2[%c75] : memref<98xf32, #tpu.memory_space<smem>>
    %437 = vector.broadcast %436 : f32 to vector<1x256xf32>
    %438 = arith.mulf %437, %435 : vector<1x256xf32>
    %439 = arith.addf %434, %438 : vector<1x256xf32>
    %440 = vector.extract_strided_slice %10 {offsets = [1, 146], sizes = [1, 256], strides = [1, 1]} : vector<2x512xf32> to vector<1x256xf32>
    %c82 = arith.constant 82 : index
    %441 = memref.load %arg2[%c82] : memref<98xf32, #tpu.memory_space<smem>>
    %442 = vector.broadcast %441 : f32 to vector<1x256xf32>
    %443 = arith.mulf %442, %440 : vector<1x256xf32>
    %444 = arith.addf %439, %443 : vector<1x256xf32>
    %445 = vector.extract_strided_slice %10 {offsets = [1, 162], sizes = [1, 256], strides = [1, 1]} : vector<2x512xf32> to vector<1x256xf32>
    %c89 = arith.constant 89 : index
    %446 = memref.load %arg2[%c89] : memref<98xf32, #tpu.memory_space<smem>>
    %447 = vector.broadcast %446 : f32 to vector<1x256xf32>
    %448 = arith.mulf %447, %445 : vector<1x256xf32>
    %449 = arith.addf %444, %448 : vector<1x256xf32>
    %450 = vector.extract_strided_slice %10 {offsets = [1, 178], sizes = [1, 256], strides = [1, 1]} : vector<2x512xf32> to vector<1x256xf32>
    %c96 = arith.constant 96 : index
    %451 = memref.load %arg2[%c96] : memref<98xf32, #tpu.memory_space<smem>>
    %452 = vector.broadcast %451 : f32 to vector<1x256xf32>
    %453 = arith.mulf %452, %450 : vector<1x256xf32>
    %454 = arith.addf %449, %453 : vector<1x256xf32>
    %455 = arith.mulf %383, %454 : vector<1x256xf32>
    %456 = arith.addf %382, %455 : vector<1x256xf32>
    %457 = vector.extract_strided_slice %11 {offsets = [6, 0], sizes = [1, 256], strides = [1, 1]} : vector<7x256xf32> to vector<1x256xf32>
    %cst_15 = arith.constant 0.000000e+00 : f32
    %458 = vector.broadcast %cst_15 : f32 to vector<1x256xf32>
    %459 = vector.extract_strided_slice %10 {offsets = [0, 83], sizes = [1, 256], strides = [1, 1]} : vector<2x512xf32> to vector<1x256xf32>
    %c6 = arith.constant 6 : index
    %460 = memref.load %arg2[%c6] : memref<98xf32, #tpu.memory_space<smem>>
    %461 = vector.broadcast %460 : f32 to vector<1x256xf32>
    %462 = arith.mulf %461, %459 : vector<1x256xf32>
    %463 = arith.addf %458, %462 : vector<1x256xf32>
    %464 = vector.extract_strided_slice %10 {offsets = [0, 99], sizes = [1, 256], strides = [1, 1]} : vector<2x512xf32> to vector<1x256xf32>
    %c13 = arith.constant 13 : index
    %465 = memref.load %arg2[%c13] : memref<98xf32, #tpu.memory_space<smem>>
    %466 = vector.broadcast %465 : f32 to vector<1x256xf32>
    %467 = arith.mulf %466, %464 : vector<1x256xf32>
    %468 = arith.addf %463, %467 : vector<1x256xf32>
    %469 = vector.extract_strided_slice %10 {offsets = [0, 115], sizes = [1, 256], strides = [1, 1]} : vector<2x512xf32> to vector<1x256xf32>
    %c20 = arith.constant 20 : index
    %470 = memref.load %arg2[%c20] : memref<98xf32, #tpu.memory_space<smem>>
    %471 = vector.broadcast %470 : f32 to vector<1x256xf32>
    %472 = arith.mulf %471, %469 : vector<1x256xf32>
    %473 = arith.addf %468, %472 : vector<1x256xf32>
    %474 = vector.extract_strided_slice %10 {offsets = [0, 131], sizes = [1, 256], strides = [1, 1]} : vector<2x512xf32> to vector<1x256xf32>
    %c27 = arith.constant 27 : index
    %475 = memref.load %arg2[%c27] : memref<98xf32, #tpu.memory_space<smem>>
    %476 = vector.broadcast %475 : f32 to vector<1x256xf32>
    %477 = arith.mulf %476, %474 : vector<1x256xf32>
    %478 = arith.addf %473, %477 : vector<1x256xf32>
    %479 = vector.extract_strided_slice %10 {offsets = [0, 147], sizes = [1, 256], strides = [1, 1]} : vector<2x512xf32> to vector<1x256xf32>
    %c34 = arith.constant 34 : index
    %480 = memref.load %arg2[%c34] : memref<98xf32, #tpu.memory_space<smem>>
    %481 = vector.broadcast %480 : f32 to vector<1x256xf32>
    %482 = arith.mulf %481, %479 : vector<1x256xf32>
    %483 = arith.addf %478, %482 : vector<1x256xf32>
    %484 = vector.extract_strided_slice %10 {offsets = [0, 163], sizes = [1, 256], strides = [1, 1]} : vector<2x512xf32> to vector<1x256xf32>
    %c41 = arith.constant 41 : index
    %485 = memref.load %arg2[%c41] : memref<98xf32, #tpu.memory_space<smem>>
    %486 = vector.broadcast %485 : f32 to vector<1x256xf32>
    %487 = arith.mulf %486, %484 : vector<1x256xf32>
    %488 = arith.addf %483, %487 : vector<1x256xf32>
    %489 = vector.extract_strided_slice %10 {offsets = [0, 179], sizes = [1, 256], strides = [1, 1]} : vector<2x512xf32> to vector<1x256xf32>
    %c48 = arith.constant 48 : index
    %490 = memref.load %arg2[%c48] : memref<98xf32, #tpu.memory_space<smem>>
    %491 = vector.broadcast %490 : f32 to vector<1x256xf32>
    %492 = arith.mulf %491, %489 : vector<1x256xf32>
    %493 = arith.addf %488, %492 : vector<1x256xf32>
    %494 = vector.extract_strided_slice %10 {offsets = [1, 83], sizes = [1, 256], strides = [1, 1]} : vector<2x512xf32> to vector<1x256xf32>
    %c55 = arith.constant 55 : index
    %495 = memref.load %arg2[%c55] : memref<98xf32, #tpu.memory_space<smem>>
    %496 = vector.broadcast %495 : f32 to vector<1x256xf32>
    %497 = arith.mulf %496, %494 : vector<1x256xf32>
    %498 = arith.addf %493, %497 : vector<1x256xf32>
    %499 = vector.extract_strided_slice %10 {offsets = [1, 99], sizes = [1, 256], strides = [1, 1]} : vector<2x512xf32> to vector<1x256xf32>
    %c62 = arith.constant 62 : index
    %500 = memref.load %arg2[%c62] : memref<98xf32, #tpu.memory_space<smem>>
    %501 = vector.broadcast %500 : f32 to vector<1x256xf32>
    %502 = arith.mulf %501, %499 : vector<1x256xf32>
    %503 = arith.addf %498, %502 : vector<1x256xf32>
    %504 = vector.extract_strided_slice %10 {offsets = [1, 115], sizes = [1, 256], strides = [1, 1]} : vector<2x512xf32> to vector<1x256xf32>
    %c69 = arith.constant 69 : index
    %505 = memref.load %arg2[%c69] : memref<98xf32, #tpu.memory_space<smem>>
    %506 = vector.broadcast %505 : f32 to vector<1x256xf32>
    %507 = arith.mulf %506, %504 : vector<1x256xf32>
    %508 = arith.addf %503, %507 : vector<1x256xf32>
    %509 = vector.extract_strided_slice %10 {offsets = [1, 131], sizes = [1, 256], strides = [1, 1]} : vector<2x512xf32> to vector<1x256xf32>
    %c76 = arith.constant 76 : index
    %510 = memref.load %arg2[%c76] : memref<98xf32, #tpu.memory_space<smem>>
    %511 = vector.broadcast %510 : f32 to vector<1x256xf32>
    %512 = arith.mulf %511, %509 : vector<1x256xf32>
    %513 = arith.addf %508, %512 : vector<1x256xf32>
    %514 = vector.extract_strided_slice %10 {offsets = [1, 147], sizes = [1, 256], strides = [1, 1]} : vector<2x512xf32> to vector<1x256xf32>
    %c83 = arith.constant 83 : index
    %515 = memref.load %arg2[%c83] : memref<98xf32, #tpu.memory_space<smem>>
    %516 = vector.broadcast %515 : f32 to vector<1x256xf32>
    %517 = arith.mulf %516, %514 : vector<1x256xf32>
    %518 = arith.addf %513, %517 : vector<1x256xf32>
    %519 = vector.extract_strided_slice %10 {offsets = [1, 163], sizes = [1, 256], strides = [1, 1]} : vector<2x512xf32> to vector<1x256xf32>
    %c90 = arith.constant 90 : index
    %520 = memref.load %arg2[%c90] : memref<98xf32, #tpu.memory_space<smem>>
    %521 = vector.broadcast %520 : f32 to vector<1x256xf32>
    %522 = arith.mulf %521, %519 : vector<1x256xf32>
    %523 = arith.addf %518, %522 : vector<1x256xf32>
    %524 = vector.extract_strided_slice %10 {offsets = [1, 179], sizes = [1, 256], strides = [1, 1]} : vector<2x512xf32> to vector<1x256xf32>
    %c97 = arith.constant 97 : index
    %525 = memref.load %arg2[%c97] : memref<98xf32, #tpu.memory_space<smem>>
    %526 = vector.broadcast %525 : f32 to vector<1x256xf32>
    %527 = arith.mulf %526, %524 : vector<1x256xf32>
    %528 = arith.addf %523, %527 : vector<1x256xf32>
    %529 = arith.mulf %457, %528 : vector<1x256xf32>
    %530 = arith.addf %456, %529 : vector<1x256xf32>
    %cst_16 = arith.constant 0.000000e+00 : f32
    %531 = vector.broadcast %cst_16 : f32 to vector<1x256xf32>
    %532 = arith.subf %531, %530 : vector<1x256xf32>
    %533 = math.exp %532 : vector<1x256xf32>
    %cst_17 = arith.constant 1.000000e+00 : f32
    %534 = vector.broadcast %cst_17 : f32 to vector<1x256xf32>
    %535 = arith.addf %534, %533 : vector<1x256xf32>
    %cst_18 = arith.constant 1.000000e+00 : f32
    %536 = vector.broadcast %cst_18 : f32 to vector<1x256xf32>
    %537 = arith.divf %536, %535 : vector<1x256xf32>
    %538 = vector.broadcast %537 : vector<1x256xf32> to vector<8x256xf32>
    %539 = arith.mulf %1, %538 : vector<8x256xf32>
    %c0_19 = arith.constant 0 : index
    %c0_20 = arith.constant 0 : index
    %c0_21 = arith.constant 0 : index
    %540 = vector.load %arg4[%c0_19, %c0_20, %c0_21] : memref<1x8x256xf32, #tpu.memory_space<vmem>>, vector<1x8x256xf32>
    %541 = vector.shape_cast %540 : vector<1x8x256xf32> to vector<8x256xf32>
    %542 = vector.shape_cast %539 : vector<8x256xf32> to vector<1x8x256xf32>
    tpu.vector_store %arg4[%c0_19, %c0_20, %c0_21], %542 {strides = array<i32>} : memref<1x8x256xf32, #tpu.memory_space<vmem>>, vector<1x8x256xf32>,
    return
  }
  func.func @transform_0(%arg0: i32) -> (i32, i32, i32) {
    %c0_i32 = arith.constant 0 : i32
    %c0_i32_0 = arith.constant 0 : i32
    %c0_i32_1 = arith.constant 0 : i32
    return %arg0, %c0_i32, %c0_i32_0 : i32, i32, i32
  }
  func.func @transform_1(%arg0: i32) -> i32 {
    %c0_i32 = arith.constant 0 : i32
    %c0_i32_0 = arith.constant 0 : i32
    return %c0_i32 : i32
  }
  func.func @transform_2(%arg0: i32) -> (i32, i32) {
    %c0_i32 = arith.constant 0 : i32
    %c0_i32_0 = arith.constant 0 : i32
    %c0_i32_1 = arith.constant 0 : i32
    return %c0_i32, %c0_i32_0 : i32, i32
  }
  func.func @transform_3(%arg0: i32) -> (i32, i32, i32) {
    %c0_i32 = arith.constant 0 : i32
    %c0_i32_0 = arith.constant 0 : i32
    %c0_i32_1 = arith.constant 0 : i32
    return %arg0, %c0_i32, %c0_i32_0 : i32, i32, i32
  }
}

</mosaic_0001>

<llo_original>
// kernel: spatial_attention_forward.1
$region0: #{spatial_attention_forward.1}
  #allocation0 [shape = 'u32[]', space=smem, size = 0x4, offset = 0x4, fixed_abs, tag = 'smem constant byte address 0x4 - core index']
  #allocation1 [shape = 'u32[144,128]{1,0:T(1,128)}', space=vmem, size = 0x12000, scoped, tag = 'internal scratch']
  %s0 = inlined_call_operand.vmem [shape: f32[2,8,256], index: 0, kind: input, shape index: {}]
  %s1 = inlined_call_operand.vmem [shape: f32[98], index: 1, kind: input, shape index: {}]
  %s2 = inlined_call_operand.vmem [shape: f32[7,256], index: 2, kind: input, shape index: {}]
  %s3 = inlined_call_operand.vmem [shape: f32[2,8,256], index: 3, kind: output, shape index: {}]
  %s4 = sld [smem:[#allocation0]]
  $region49: #{spatial_attention_forward.1} parent=0
    _
  %s6 = ssub.s32 1, %s4
  %s7 = scalar_select 0, %s6, %s4
  $region1: #{spatial_attention_forward.1} parent=0
    #allocation2 [shape = 'u8[512]{0}', space=smem, size = 0x200, scoped, tag = 'input window, operand 1, single buffered']
    #allocation3 [shape = 's32[2]{0}', space=sflag, size = 0x8, scoped, tag = 'scoped memory for spatial_attention_forward.1']
    %8 = vsyncpa [#allocation3], 0
    loop: start=0, step=1, limit=4
    $region2: #{spatial_attention_forward.1} parent=1 // loop_pre_header
      _
    $region3: #{spatial_attention_forward.1} parent=1 // loop_header
      %s10 = sphi 0, %s14
      %p11 = scmp.ge.s32.totalorder %s10, 4
      %s20 = sphi 0, %s22
      %s23 = sphi 0, %s20
      %s24 = sphi 0, %s23
      %s40 = sphi 0, %s24
      %s44 = sphi 0, %s44
      %s46 = sphi 0, %s44
      %s47 = sphi 0, %s46
      %s61 = sphi 0, %s47
      %s65 = sphi 0, %s65
      %s67 = sphi 0, %s65
      %s68 = sphi 0, %s67
      %s82 = sphi 0, %s68
      %s88 = sphi 0, %s90
      %s91 = sphi 0, %s88
      %s92 = sphi 0, %s91
      %s108 = sphi 0, %s92
    $region4: #{spatial_attention_forward.1} parent=1 // loop_header_branch
      %13 = sbr.rel (%p11) target = $region8
    $region5: #{spatial_attention_forward.1} parent=1 // loop_body
      %s15 = ssub.s32 %s10, 1
      %s16 = ssub.s32 %s10, 2
      %s17 = sadd.s32 %s10, 1
      %s18 = ssub.s32 %s10, %s17
      %p19 = scmp.eq.s32.totalorder %s18, 0
      %s21 = sadd.s32 %s20, 1
      %s22 = scalar_select %p19, %s20, %s21
      %p25 = pneg %p19
      %p26 = scmp.eq.s32.totalorder %s10, 1
      %p27 = por %p25, %p26
      %p28 = scmp.ne.s32.totalorder %s20, %s23
      %p29 = scmp.eq.s32.totalorder %s10, 0
      %p30 = por %p28, %p29
      %p31 = scmp.ne.s32.totalorder %s20, %s23
      %p32 = scmp.eq.s32.totalorder %s15, 1
      %p33 = por %p31, %p32
      %p34 = scmp.ne.s32.totalorder %s23, %s24
      %p35 = scmp.eq.s32.totalorder %s15, 0
      %p36 = por %p34, %p35
      %p37 = scmp.ne.s32.totalorder %s23, %s24
      %p38 = scmp.eq.s32.totalorder %s16, 1
      %p39 = por %p37, %p38
      %p41 = scmp.ne.s32.totalorder %s24, %s40
      %p42 = scmp.eq.s32.totalorder %s16, 0
      %p43 = por %p41, %p42
      %s45 = sadd.s32 %s44, 1
      %p48 = scmp.eq.s32.totalorder %s10, 1
      %p49 = scmp.ne.s32.totalorder %s44, %s46
      %p50 = scmp.eq.s32.totalorder %s10, 0
      %p51 = por %p49, %p50
      %p52 = scmp.ne.s32.totalorder %s44, %s46
      %p53 = scmp.eq.s32.totalorder %s15, 1
      %p54 = por %p52, %p53
      %p55 = scmp.ne.s32.totalorder %s46, %s47
      %p56 = scmp.eq.s32.totalorder %s15, 0
      %p57 = por %p55, %p56
      %p58 = scmp.ne.s32.totalorder %s46, %s47
      %p59 = scmp.eq.s32.totalorder %s16, 1
      %p60 = por %p58, %p59
      %p62 = scmp.ne.s32.totalorder %s47, %s61
      %p63 = scmp.eq.s32.totalorder %s16, 0
      %p64 = por %p62, %p63
      %s66 = sadd.s32 %s65, 1
      %p69 = scmp.eq.s32.totalorder %s10, 1
      %p70 = scmp.ne.s32.totalorder %s65, %s67
      %p71 = scmp.eq.s32.totalorder %s10, 0
      %p72 = por %p70, %p71
      %p73 = scmp.ne.s32.totalorder %s65, %s67
      %p74 = scmp.eq.s32.totalorder %s15, 1
      %p75 = por %p73, %p74
      %p76 = scmp.ne.s32.totalorder %s67, %s68
      %p77 = scmp.eq.s32.totalorder %s15, 0
      %p78 = por %p76, %p77
      %p79 = scmp.ne.s32.totalorder %s67, %s68
      %p80 = scmp.eq.s32.totalorder %s16, 1
      %p81 = por %p79, %p80
      %p83 = scmp.ne.s32.totalorder %s68, %s82
      %p84 = scmp.eq.s32.totalorder %s16, 0
      %p85 = por %p83, %p84
      %s86 = ssub.s32 %s10, %s17
      %p87 = scmp.eq.s32.totalorder %s86, 0
      %s89 = sadd.s32 %s88, 1
      %s90 = scalar_select %p87, %s88, %s89
      %p93 = pneg %p87
      %p94 = scmp.eq.s32.totalorder %s10, 1
      %p95 = por %p93, %p94
      %p96 = scmp.ne.s32.totalorder %s88, %s91
      %p97 = scmp.eq.s32.totalorder %s10, 0
      %p98 = por %p96, %p97
      %p99 = scmp.ne.s32.totalorder %s88, %s91
      %p100 = scmp.eq.s32.totalorder %s15, 1
      %p101 = por %p99, %p100
      %p102 = scmp.ne.s32.totalorder %s91, %s92
      %p103 = scmp.eq.s32.totalorder %s15, 0
      %p104 = por %p102, %p103
      %p105 = scmp.ne.s32.totalorder %s91, %s92
      %p106 = scmp.eq.s32.totalorder %s16, 1
      %p107 = por %p105, %p106
      %p109 = scmp.ne.s32.totalorder %s92, %s108
      %p110 = scmp.eq.s32.totalorder %s16, 0
      %p111 = por %p109, %p110
      %p112 = scmp.le.s32.totalorder 1, %s10
      %p113 = scmp.lt.s32.totalorder %s10, 3
      %p114 = pnand %p112, %p113
      %p115 = pneg %p114
      // Predicated region
      $region9: #{spatial_attention_forward.1} parent=5 // pred_check
        _
      $region10: #{spatial_attention_forward.1} parent=5 // pred_check_branch
        %117 = sbr.rel (%p114) target = $region12
      $region11: #{spatial_attention_forward.1} parent=5 // pred_region
        %s118 = ssub.s32 %s10, 1
        // Predicated region
        $region13: #{spatial_attention_forward.1} parent=11 // pred_check
          %p119 = pneg %p57
        $region14: #{spatial_attention_forward.1} parent=11 // pred_check_branch
          %121 = sbr.rel (%p119) target = $region16
        $region15: #{spatial_attention_forward.1} parent=11 // pred_region
          %s123 = ssub.s32 16, 16
          %124 = vsyncadd [#allocation3], %s123
          %s126 = sshll.u32 %s1, 4
          %s127 = int_to_ptr.vmem [resolvable:$true] %s126
          %129 = dma.vmem_to_smem %s127, 16, [#allocation2], [#allocation3]
        $region16: #{spatial_attention_forward.1} parent=11 // pred_fallthru
          _
        // Predicated region
        $region17: #{spatial_attention_forward.1} parent=11 // pred_check
          %p130 = pneg %p78
        $region18: #{spatial_attention_forward.1} parent=11 // pred_check_branch
          %132 = sbr.rel (%p130) target = $region20
        $region19: #{spatial_attention_forward.1} parent=11 // pred_region
          _
        $region20: #{spatial_attention_forward.1} parent=11 // pred_fallthru
          _
      $region12: #{spatial_attention_forward.1} parent=5 // pred_fallthru
        _
      %p133 = scmp.lt.s32.totalorder %s10, 2
      // Predicated region
      $region21: #{spatial_attention_forward.1} parent=5 // pred_check
        %p134 = pneg %p133
      $region22: #{spatial_attention_forward.1} parent=5 // pred_check_branch
        %136 = sbr.rel (%p134) target = $region24
      $region23: #{spatial_attention_forward.1} parent=5 // pred_region
        // Predicated region
        $region25: #{spatial_attention_forward.1} parent=23 // pred_check
          %p137 = pneg %p30
        $region26: #{spatial_attention_forward.1} parent=23 // pred_check_branch
          %139 = sbr.rel (%p137) target = $region28
        $region27: #{spatial_attention_forward.1} parent=23 // pred_region
          %p140 = scmp.lt.s32.totalorder %s10, 1
          %s141 = scalar_select %p140, %s10, 1
          %s142 = smul.addr %s141, 2
          %s143 = smul.addr %s142, 8
          %s144 = scalar_lea.vmem %s0, %s143
        $region28: #{spatial_attention_forward.1} parent=23 // pred_fallthru
          _
      $region24: #{spatial_attention_forward.1} parent=5 // pred_fallthru
        _
      %p145 = scmp.le.s32.totalorder 1, %s10
      %p146 = scmp.lt.s32.totalorder %s10, 3
      %p147 = pnand %p145, %p146
      %p148 = pneg %p147
      // Predicated region
      $region29: #{spatial_attention_forward.1} parent=5 // pred_check
        _
      $region30: #{spatial_attention_forward.1} parent=5 // pred_check_branch
        %150 = sbr.rel (%p147) target = $region32
      $region31: #{spatial_attention_forward.1} parent=5 // pred_region
        %s151 = ssub.s32 %s10, 1
        // Predicated region
        $region33: #{spatial_attention_forward.1} parent=31 // pred_check
          %p152 = pneg %p57
        $region34: #{spatial_attention_forward.1} parent=31 // pred_check_branch
          %154 = sbr.rel (%p152) target = $region36
        $region35: #{spatial_attention_forward.1} parent=31 // pred_region
          %155 = dma.done [#allocation3], 16
        $region36: #{spatial_attention_forward.1} parent=31 // pred_fallthru
          _
        %156 = sfence
        %p157 = scmp.lt.s32.totalorder %s15, 1
        %s158 = scalar_select %p157, %s15, 1
        %s159 = smul.addr %s158, 2
        %s160 = smul.addr %s159, 8
        %s161 = scalar_lea.vmem %s0, %s160
        %p162 = pneg %p36
        %p163 = pneg %p33
        %p164 = pneg %p57
        %p165 = pneg %p54
        %p166 = pneg %p78
        %p167 = pneg %p75
        %p168 = pneg %p104
        %p169 = pneg %p101
        %p170 = scmp.lt.s32.totalorder %s15, 1
        %s171 = scalar_select %p170, %s15, 1
        %s172 = smul.addr %s171, 2
        %s173 = smul.addr %s172, 8
        %s174 = scalar_lea.vmem %s3, %s173
        %p175 = scmp.lt.s32.totalorder %s15, 1
        %s176 = scalar_select %p175, %s15, 1
        %s177 = smul.addr %s176, 2
        %s178 = smul.addr %s177, 8
        %s179 = scalar_lea.vmem %s0, %s178
        %p180 = scmp.lt.s32.totalorder %s15, 1
        %s181 = scalar_select %p180, %s15, 1
        %s182 = smul.addr %s181, 2
        %s183 = smul.addr %s182, 8
        %s184 = scalar_lea.vmem %s3, %s183
        %v185 = vld [vmem:[%s179] sm:$0xff]
        %v186 = vld [vmem:[%s179 + $0x8] sm:$0xff]
        %v187 = vrot.slane %v185, 4
        %v188 = vadd.f32 %v185, %v187
        %v189 = vrot.slane %v188, 2
        %v190 = vadd.f32 %v188, %v189
        %v191 = vrot.slane %v190, 1
        %v192 = vadd.f32 %v190, %v191
        %v193 = vrot.slane %v186, 4
        %v194 = vadd.f32 %v186, %v193
        %v195 = vrot.slane %v194, 2
        %v196 = vadd.f32 %v194, %v195
        %v197 = vrot.slane %v196, 1
        %v198 = vadd.f32 %v196, %v197
        %v199 = vrcp.pop 8.0
        %v200 = vmul.f32 %v192, %v199
        %v201 = vmul.f32 %v198, %v199
        %v202 = vrot.slane %v185, 4
        %v203 = vmax.f32 %v185, %v202
        %v204 = vrot.slane %v203, 2
        %v205 = vmax.f32 %v203, %v204
        %v206 = vrot.slane %v205, 1
        %v207 = vmax.f32 %v205, %v206
        %v208 = vrot.slane %v186, 4
        %v209 = vmax.f32 %v186, %v208
        %v210 = vrot.slane %v209, 2
        %v211 = vmax.f32 %v209, %v210
        %v212 = vrot.slane %v211, 1
        %v213 = vmax.f32 %v211, %v212
        %vm214 = vcmask 1040384
        %v215 = vsel %vm214, %v200, %v207
        %v216 = vsel %vm214, %v201, %v213
        %v217 = vld [vmem:[%s2] sm:$0x7f]
        %v218 = vld [vmem:[%s2 + $0x8] sm:$0x7f]
        %s219 = sld [smem:[#allocation2]]
        %v220 = vstv %s219
        %v221 = vmul.f32 %v220, 0.0
        %v222 = vmul.f32 %v220, %v215
        %v223 = vmul.f32 %v220, %v216
        %v224 = vadd.f32 %v221, 0.0
        %v225 = vadd.f32 %v222, 0.0
        %v226 = vadd.f32 %v223, 0.0
        %s227 = sld [smem:[#allocation2 + $0x7]]
        %v228 = vstv %s227
        %v229 = vmul.f32 %v228, 0.0
        %v230 = vmul.f32 %v228, %v215
        %v231 = vmul.f32 %v228, %v216
        %235 = vrot.lane.b32.xlu0 %v229, 112
        %v236 = vpop.permute.xlu0 %235
        %237 = vrot.lane.b32.xlu0 %v230, 112
        %v238 = vpop.permute.xlu0 %237
        %239 = vrot.lane.b32.xlu0 %v231, 112
        %v240 = vpop.permute.xlu0 %239
        %vm241 = vcmask 916480
        %v242 = vsel %vm241, %v236, %v238
        %v243 = vsel %vm241, %v238, %v240
        %v247 = vadd.f32 %v224, %v242
        %v248 = vadd.f32 %v225, %v243
        %v249 = vadd.f32 %v226, %v240
        %s250 = sld [smem:[#allocation2 + $0xe]]
        %v251 = vstv %s250
        %v252 = vmul.f32 %v251, 0.0
        %v253 = vmul.f32 %v251, %v215
        %v254 = vmul.f32 %v251, %v216
        %258 = vrot.lane.b32.xlu0 %v252, 96
        %v259 = vpop.permute.xlu0 %258
        %260 = vrot.lane.b32.xlu0 %v253, 96
        %v261 = vpop.permute.xlu0 %260
        %262 = vrot.lane.b32.xlu0 %v254, 96
        %v263 = vpop.permute.xlu0 %262
        %vm264 = vcmask 785408
        %v265 = vsel %vm264, %v259, %v261
        %v266 = vsel %vm264, %v261, %v263
        %v270 = vadd.f32 %v247, %v265
        %v271 = vadd.f32 %v248, %v266
        %v272 = vadd.f32 %v249, %v263
        %s273 = sld [smem:[#allocation2 + $0x15]]
        %v274 = vstv %s273
        %v275 = vmul.f32 %v274, 0.0
        %v276 = vmul.f32 %v274, %v215
        %v277 = vmul.f32 %v274, %v216
        %281 = vrot.lane.b32.xlu0 %v275, 80
        %v282 = vpop.permute.xlu0 %281
        %283 = vrot.lane.b32.xlu0 %v276, 80
        %v284 = vpop.permute.xlu0 %283
        %285 = vrot.lane.b32.xlu0 %v277, 80
        %v286 = vpop.permute.xlu0 %285
        %vm287 = vcmask 654336
        %v288 = vsel %vm287, %v282, %v284
        %v289 = vsel %vm287, %v284, %v286
        %v293 = vadd.f32 %v270, %v288
        %v294 = vadd.f32 %v271, %v289
        %v295 = vadd.f32 %v272, %v286
        %s296 = sld [smem:[#allocation2 + $0x1c]]
        %v297 = vstv %s296
        %v298 = vmul.f32 %v297, %v215
        %v299 = vmul.f32 %v297, %v216
        %v300 = vmul.f32 %v297, 0.0
        %304 = vrot.lane.b32.xlu0 %v298, 64
        %v305 = vpop.permute.xlu0 %304
        %306 = vrot.lane.b32.xlu0 %v299, 64
        %v307 = vpop.permute.xlu0 %306
        %308 = vrot.lane.b32.xlu0 %v300, 64
        %v309 = vpop.permute.xlu0 %308
        %vm310 = vcmask 523264
        %v311 = vsel %vm310, %v305, %v307
        %v312 = vsel %vm310, %v307, %v309
        %v316 = vadd.f32 %v293, %v305
        %v317 = vadd.f32 %v294, %v311
        %v318 = vadd.f32 %v295, %v312
        %s319 = sld [smem:[#allocation2 + $0x23]]
        %v320 = vstv %s319
        %v321 = vmul.f32 %v320, %v215
        %v322 = vmul.f32 %v320, %v216
        %v323 = vmul.f32 %v320, 0.0
        %327 = vrot.lane.b32.xlu0 %v321, 48
        %v328 = vpop.permute.xlu0 %327
        %329 = vrot.lane.b32.xlu0 %v322, 48
        %v330 = vpop.permute.xlu0 %329
        %331 = vrot.lane.b32.xlu0 %v323, 48
        %v332 = vpop.permute.xlu0 %331
        %vm333 = vcmask 392192
        %v334 = vsel %vm333, %v328, %v330
        %v335 = vsel %vm333, %v330, %v332
        %v339 = vadd.f32 %v316, %v328
        %v340 = vadd.f32 %v317, %v334
        %v341 = vadd.f32 %v318, %v335
        %s342 = sld [smem:[#allocation2 + $0x2a]]
        %v343 = vstv %s342
        %v344 = vmul.f32 %v343, %v215
        %v345 = vmul.f32 %v343, %v216
        %v346 = vmul.f32 %v343, 0.0
        %350 = vrot.lane.b32.xlu0 %v344, 32
        %v351 = vpop.permute.xlu0 %350
        %352 = vrot.lane.b32.xlu0 %v345, 32
        %v353 = vpop.permute.xlu0 %352
        %354 = vrot.lane.b32.xlu0 %v346, 32
        %v355 = vpop.permute.xlu0 %354
        %vm356 = vcmask 261120
        %v357 = vsel %vm356, %v351, %v353
        %v358 = vsel %vm356, %v353, %v355
        %v362 = vadd.f32 %v339, %v351
        %v363 = vadd.f32 %v340, %v357
        %v364 = vadd.f32 %v341, %v358
        %s365 = sld [smem:[#allocation2 + $0x31]]
        %v366 = vstv %s365
        %v367 = vmul.f32 %v366, 0.0
        %v368 = vmul.f32 %v366, %v215
        %v369 = vmul.f32 %v366, %v216
        %v373 = vrot.slane %v367, 1
        %v374 = vrot.slane %v368, 1
        %v375 = vrot.slane %v369, 1
        %v379 = vadd.f32 %v362, %v373
        %v380 = vadd.f32 %v363, %v374
        %v381 = vadd.f32 %v364, %v375
        %s382 = sld [smem:[#allocation2 + $0x38]]
        %v383 = vstv %s382
        %v384 = vmul.f32 %v383, 0.0
        %v385 = vmul.f32 %v383, %v215
        %v386 = vmul.f32 %v383, %v216
        %v390 = vrot.slane %v384, 1
        %v391 = vrot.slane %v385, 1
        %v392 = vrot.slane %v386, 1
        %393 = vrot.lane.b32.xlu0 %v390, 112
        %v394 = vpop.permute.xlu0 %393
        %395 = vrot.lane.b32.xlu0 %v391, 112
        %v396 = vpop.permute.xlu0 %395
        %397 = vrot.lane.b32.xlu0 %v392, 112
        %v398 = vpop.permute.xlu0 %397
        %v399 = vsel %vm241, %v394, %v396
        %v400 = vsel %vm241, %v396, %v398
        %v404 = vadd.f32 %v379, %v399
        %v405 = vadd.f32 %v380, %v400
        %v406 = vadd.f32 %v381, %v398
        %s407 = sld [smem:[#allocation2 + $0x3f]]
        %v408 = vstv %s407
        %v409 = vmul.f32 %v408, 0.0
        %v410 = vmul.f32 %v408, %v215
        %v411 = vmul.f32 %v408, %v216
        %v415 = vrot.slane %v409, 1
        %v416 = vrot.slane %v410, 1
        %v417 = vrot.slane %v411, 1
        %418 = vrot.lane.b32.xlu0 %v415, 96
        %v419 = vpop.permute.xlu0 %418
        %420 = vrot.lane.b32.xlu0 %v416, 96
        %v421 = vpop.permute.xlu0 %420
        %422 = vrot.lane.b32.xlu0 %v417, 96
        %v423 = vpop.permute.xlu0 %422
        %v424 = vsel %vm264, %v419, %v421
        %v425 = vsel %vm264, %v421, %v423
        %v429 = vadd.f32 %v404, %v424
        %v430 = vadd.f32 %v405, %v425
        %v431 = vadd.f32 %v406, %v423
        %s432 = sld [smem:[#allocation2 + $0x46]]
        %v433 = vstv %s432
        %v434 = vmul.f32 %v433, 0.0
        %v435 = vmul.f32 %v433, %v215
        %v436 = vmul.f32 %v433, %v216
        %v440 = vrot.slane %v434, 1
        %v441 = vrot.slane %v435, 1
        %v442 = vrot.slane %v436, 1
        %443 = vrot.lane.b32.xlu0 %v440, 80
        %v444 = vpop.permute.xlu0 %443
        %445 = vrot.lane.b32.xlu0 %v441, 80
        %v446 = vpop.permute.xlu0 %445
        %447 = vrot.lane.b32.xlu0 %v442, 80
        %v448 = vpop.permute.xlu0 %447
        %v449 = vsel %vm287, %v444, %v446
        %v450 = vsel %vm287, %v446, %v448
        %v454 = vadd.f32 %v429, %v449
        %v455 = vadd.f32 %v430, %v450
        %v456 = vadd.f32 %v431, %v448
        %s457 = sld [smem:[#allocation2 + $0x4d]]
        %v458 = vstv %s457
        %v459 = vmul.f32 %v458, %v215
        %v460 = vmul.f32 %v458, %v216
        %v461 = vmul.f32 %v458, 0.0
        %v465 = vrot.slane %v459, 1
        %v466 = vrot.slane %v460, 1
        %v467 = vrot.slane %v461, 1
        %468 = vrot.lane.b32.xlu0 %v465, 64
        %v469 = vpop.permute.xlu0 %468
        %470 = vrot.lane.b32.xlu0 %v466, 64
        %v471 = vpop.permute.xlu0 %470
        %472 = vrot.lane.b32.xlu0 %v467, 64
        %v473 = vpop.permute.xlu0 %472
        %v474 = vsel %vm310, %v469, %v471
        %v475 = vsel %vm310, %v471, %v473
        %v479 = vadd.f32 %v454, %v469
        %v480 = vadd.f32 %v455, %v474
        %v481 = vadd.f32 %v456, %v475
        %s482 = sld [smem:[#allocation2 + $0x54]]
        %v483 = vstv %s482
        %v484 = vmul.f32 %v483, %v215
        %v485 = vmul.f32 %v483, %v216
        %v486 = vmul.f32 %v483, 0.0
        %v490 = vrot.slane %v484, 1
        %v491 = vrot.slane %v485, 1
        %v492 = vrot.slane %v486, 1
        %493 = vrot.lane.b32.xlu0 %v490, 48
        %v494 = vpop.permute.xlu0 %493
        %495 = vrot.lane.b32.xlu0 %v491, 48
        %v496 = vpop.permute.xlu0 %495
        %497 = vrot.lane.b32.xlu0 %v492, 48
        %v498 = vpop.permute.xlu0 %497
        %v499 = vsel %vm333, %v494, %v496
        %v500 = vsel %vm333, %v496, %v498
        %v504 = vadd.f32 %v479, %v494
        %v505 = vadd.f32 %v480, %v499
        %v506 = vadd.f32 %v481, %v500
        %s507 = sld [smem:[#allocation2 + $0x5b]]
        %v508 = vstv %s507
        %v509 = vmul.f32 %v508, %v215
        %v510 = vmul.f32 %v508, %v216
        %v511 = vmul.f32 %v508, 0.0
        %v515 = vrot.slane %v509, 1
        %v516 = vrot.slane %v510, 1
        %v517 = vrot.slane %v511, 1
        %518 = vrot.lane.b32.xlu0 %v515, 32
        %v519 = vpop.permute.xlu0 %518
        %520 = vrot.lane.b32.xlu0 %v516, 32
        %v521 = vpop.permute.xlu0 %520
        %522 = vrot.lane.b32.xlu0 %v517, 32
        %v523 = vpop.permute.xlu0 %522
        %v524 = vsel %vm356, %v519, %v521
        %v525 = vsel %vm356, %v521, %v523
        %v529 = vadd.f32 %v504, %v519
        %v530 = vadd.f32 %v505, %v524
        %v531 = vadd.f32 %v506, %v525
        %535 = vrot.lane.b32.xlu0 %v529, 51
        %v536 = vpop.permute.xlu0 %535
        %537 = vrot.lane.b32.xlu0 %v530, 51
        %v538 = vpop.permute.xlu0 %537
        %539 = vrot.lane.b32.xlu0 %v531, 51
        %v540 = vpop.permute.xlu0 %539
        %vm541 = vcmask 416768
        %v542 = vsel %vm541, %v536, %v538
        %v543 = vsel %vm541, %v538, %v540
        %v546 = vmul.f32 %v217, %v542
        %v547 = vmul.f32 %v218, %v543
        %v548 = vadd.f32 %v546, 0.0
        %v549 = vadd.f32 %v547, 0.0
        %s550 = sld [smem:[#allocation2 + $0x1]]
        %v551 = vstv %s550
        %v552 = vmul.f32 %v551, 0.0
        %v553 = vmul.f32 %v551, %v215
        %v554 = vmul.f32 %v551, %v216
        %v555 = vadd.f32 %v552, 0.0
        %v556 = vadd.f32 %v553, 0.0
        %v557 = vadd.f32 %v554, 0.0
        %s558 = sld [smem:[#allocation2 + $0x8]]
        %v559 = vstv %s558
        %v560 = vmul.f32 %v559, 0.0
        %v561 = vmul.f32 %v559, %v215
        %v562 = vmul.f32 %v559, %v216
        %566 = vrot.lane.b32.xlu0 %v560, 112
        %v567 = vpop.permute.xlu0 %566
        %568 = vrot.lane.b32.xlu0 %v561, 112
        %v569 = vpop.permute.xlu0 %568
        %570 = vrot.lane.b32.xlu0 %v562, 112
        %v571 = vpop.permute.xlu0 %570
        %v572 = vsel %vm241, %v567, %v569
        %v573 = vsel %vm241, %v569, %v571
        %v577 = vadd.f32 %v555, %v572
        %v578 = vadd.f32 %v556, %v573
        %v579 = vadd.f32 %v557, %v571
        %s580 = sld [smem:[#allocation2 + $0xf]]
        %v581 = vstv %s580
        %v582 = vmul.f32 %v581, 0.0
        %v583 = vmul.f32 %v581, %v215
        %v584 = vmul.f32 %v581, %v216
        %588 = vrot.lane.b32.xlu0 %v582, 96
        %v589 = vpop.permute.xlu0 %588
        %590 = vrot.lane.b32.xlu0 %v583, 96
        %v591 = vpop.permute.xlu0 %590
        %592 = vrot.lane.b32.xlu0 %v584, 96
        %v593 = vpop.permute.xlu0 %592
        %v594 = vsel %vm264, %v589, %v591
        %v595 = vsel %vm264, %v591, %v593
        %v599 = vadd.f32 %v577, %v594
        %v600 = vadd.f32 %v578, %v595
        %v601 = vadd.f32 %v579, %v593
        %s602 = sld [smem:[#allocation2 + $0x16]]
        %v603 = vstv %s602
        %v604 = vmul.f32 %v603, 0.0
        %v605 = vmul.f32 %v603, %v215
        %v606 = vmul.f32 %v603, %v216
        %610 = vrot.lane.b32.xlu0 %v604, 80
        %v611 = vpop.permute.xlu0 %610
        %612 = vrot.lane.b32.xlu0 %v605, 80
        %v613 = vpop.permute.xlu0 %612
        %614 = vrot.lane.b32.xlu0 %v606, 80
        %v615 = vpop.permute.xlu0 %614
        %v616 = vsel %vm287, %v611, %v613
        %v617 = vsel %vm287, %v613, %v615
        %v621 = vadd.f32 %v599, %v616
        %v622 = vadd.f32 %v600, %v617
        %v623 = vadd.f32 %v601, %v615
        %s624 = sld [smem:[#allocation2 + $0x1d]]
        %v625 = vstv %s624
        %v626 = vmul.f32 %v625, %v215
        %v627 = vmul.f32 %v625, %v216
        %v628 = vmul.f32 %v625, 0.0
        %632 = vrot.lane.b32.xlu0 %v626, 64
        %v633 = vpop.permute.xlu0 %632
        %634 = vrot.lane.b32.xlu0 %v627, 64
        %v635 = vpop.permute.xlu0 %634
        %636 = vrot.lane.b32.xlu0 %v628, 64
        %v637 = vpop.permute.xlu0 %636
        %v638 = vsel %vm310, %v633, %v635
        %v639 = vsel %vm310, %v635, %v637
        %v643 = vadd.f32 %v621, %v633
        %v644 = vadd.f32 %v622, %v638
        %v645 = vadd.f32 %v623, %v639
        %s646 = sld [smem:[#allocation2 + $0x24]]
        %v647 = vstv %s646
        %v648 = vmul.f32 %v647, %v215
        %v649 = vmul.f32 %v647, %v216
        %v650 = vmul.f32 %v647, 0.0
        %654 = vrot.lane.b32.xlu0 %v648, 48
        %v655 = vpop.permute.xlu0 %654
        %656 = vrot.lane.b32.xlu0 %v649, 48
        %v657 = vpop.permute.xlu0 %656
        %658 = vrot.lane.b32.xlu0 %v650, 48
        %v659 = vpop.permute.xlu0 %658
        %v660 = vsel %vm333, %v655, %v657
        %v661 = vsel %vm333, %v657, %v659
        %v665 = vadd.f32 %v643, %v655
        %v666 = vadd.f32 %v644, %v660
        %v667 = vadd.f32 %v645, %v661
        %s668 = sld [smem:[#allocation2 + $0x2b]]
        %v669 = vstv %s668
        %v670 = vmul.f32 %v669, %v215
        %v671 = vmul.f32 %v669, %v216
        %v672 = vmul.f32 %v669, 0.0
        %676 = vrot.lane.b32.xlu0 %v670, 32
        %v677 = vpop.permute.xlu0 %676
        %678 = vrot.lane.b32.xlu0 %v671, 32
        %v679 = vpop.permute.xlu0 %678
        %680 = vrot.lane.b32.xlu0 %v672, 32
        %v681 = vpop.permute.xlu0 %680
        %v682 = vsel %vm356, %v677, %v679
        %v683 = vsel %vm356, %v679, %v681
        %v687 = vadd.f32 %v665, %v677
        %v688 = vadd.f32 %v666, %v682
        %v689 = vadd.f32 %v667, %v683
        %s690 = sld [smem:[#allocation2 + $0x32]]
        %v691 = vstv %s690
        %v692 = vmul.f32 %v691, 0.0
        %v693 = vmul.f32 %v691, %v215
        %v694 = vmul.f32 %v691, %v216
        %v698 = vrot.slane %v692, 1
        %v699 = vrot.slane %v693, 1
        %v700 = vrot.slane %v694, 1
        %v704 = vadd.f32 %v687, %v698
        %v705 = vadd.f32 %v688, %v699
        %v706 = vadd.f32 %v689, %v700
        %s707 = sld [smem:[#allocation2 + $0x39]]
        %v708 = vstv %s707
        %v709 = vmul.f32 %v708, 0.0
        %v710 = vmul.f32 %v708, %v215
        %v711 = vmul.f32 %v708, %v216
        %v715 = vrot.slane %v709, 1
        %v716 = vrot.slane %v710, 1
        %v717 = vrot.slane %v711, 1
        %718 = vrot.lane.b32.xlu0 %v715, 112
        %v719 = vpop.permute.xlu0 %718
        %720 = vrot.lane.b32.xlu0 %v716, 112
        %v721 = vpop.permute.xlu0 %720
        %722 = vrot.lane.b32.xlu0 %v717, 112
        %v723 = vpop.permute.xlu0 %722
        %v724 = vsel %vm241, %v719, %v721
        %v725 = vsel %vm241, %v721, %v723
        %v729 = vadd.f32 %v704, %v724
        %v730 = vadd.f32 %v705, %v725
        %v731 = vadd.f32 %v706, %v723
        %s732 = sld [smem:[#allocation2 + $0x40]]
        %v733 = vstv %s732
        %v734 = vmul.f32 %v733, 0.0
        %v735 = vmul.f32 %v733, %v215
        %v736 = vmul.f32 %v733, %v216
        %v740 = vrot.slane %v734, 1
        %v741 = vrot.slane %v735, 1
        %v742 = vrot.slane %v736, 1
        %743 = vrot.lane.b32.xlu0 %v740, 96
        %v744 = vpop.permute.xlu0 %743
        %745 = vrot.lane.b32.xlu0 %v741, 96
        %v746 = vpop.permute.xlu0 %745
        %747 = vrot.lane.b32.xlu0 %v742, 96
        %v748 = vpop.permute.xlu0 %747
        %v749 = vsel %vm264, %v744, %v746
        %v750 = vsel %vm264, %v746, %v748
        %v754 = vadd.f32 %v729, %v749
        %v755 = vadd.f32 %v730, %v750
        %v756 = vadd.f32 %v731, %v748
        %s757 = sld [smem:[#allocation2 + $0x47]]
        %v758 = vstv %s757
        %v759 = vmul.f32 %v758, 0.0
        %v760 = vmul.f32 %v758, %v215
        %v761 = vmul.f32 %v758, %v216
        %v765 = vrot.slane %v759, 1
        %v766 = vrot.slane %v760, 1
        %v767 = vrot.slane %v761, 1
        %768 = vrot.lane.b32.xlu0 %v765, 80
        %v769 = vpop.permute.xlu0 %768
        %770 = vrot.lane.b32.xlu0 %v766, 80
        %v771 = vpop.permute.xlu0 %770
        %772 = vrot.lane.b32.xlu0 %v767, 80
        %v773 = vpop.permute.xlu0 %772
        %v774 = vsel %vm287, %v769, %v771
        %v775 = vsel %vm287, %v771, %v773
        %v779 = vadd.f32 %v754, %v774
        %v780 = vadd.f32 %v755, %v775
        %v781 = vadd.f32 %v756, %v773
        %s782 = sld [smem:[#allocation2 + $0x4e]]
        %v783 = vstv %s782
        %v784 = vmul.f32 %v783, %v215
        %v785 = vmul.f32 %v783, %v216
        %v786 = vmul.f32 %v783, 0.0
        %v790 = vrot.slane %v784, 1
        %v791 = vrot.slane %v785, 1
        %v792 = vrot.slane %v786, 1
        %793 = vrot.lane.b32.xlu0 %v790, 64
        %v794 = vpop.permute.xlu0 %793
        %795 = vrot.lane.b32.xlu0 %v791, 64
        %v796 = vpop.permute.xlu0 %795
        %797 = vrot.lane.b32.xlu0 %v792, 64
        %v798 = vpop.permute.xlu0 %797
        %v799 = vsel %vm310, %v794, %v796
        %v800 = vsel %vm310, %v796, %v798
        %v804 = vadd.f32 %v779, %v794
        %v805 = vadd.f32 %v780, %v799
        %v806 = vadd.f32 %v781, %v800
        %s807 = sld [smem:[#allocation2 + $0x55]]
        %v808 = vstv %s807
        %v809 = vmul.f32 %v808, %v215
        %v810 = vmul.f32 %v808, %v216
        %v811 = vmul.f32 %v808, 0.0
        %v815 = vrot.slane %v809, 1
        %v816 = vrot.slane %v810, 1
        %v817 = vrot.slane %v811, 1
        %818 = vrot.lane.b32.xlu0 %v815, 48
        %v819 = vpop.permute.xlu0 %818
        %820 = vrot.lane.b32.xlu0 %v816, 48
        %v821 = vpop.permute.xlu0 %820
        %822 = vrot.lane.b32.xlu0 %v817, 48
        %v823 = vpop.permute.xlu0 %822
        %v824 = vsel %vm333, %v819, %v821
        %v825 = vsel %vm333, %v821, %v823
        %v829 = vadd.f32 %v804, %v819
        %v830 = vadd.f32 %v805, %v824
        %v831 = vadd.f32 %v806, %v825
        %s832 = sld [smem:[#allocation2 + $0x5c]]
        %v833 = vstv %s832
        %v834 = vmul.f32 %v833, %v215
        %v835 = vmul.f32 %v833, %v216
        %v836 = vmul.f32 %v833, 0.0
        %v840 = vrot.slane %v834, 1
        %v841 = vrot.slane %v835, 1
        %v842 = vrot.slane %v836, 1
        %843 = vrot.lane.b32.xlu0 %v840, 32
        %v844 = vpop.permute.xlu0 %843
        %845 = vrot.lane.b32.xlu0 %v841, 32
        %v846 = vpop.permute.xlu0 %845
        %847 = vrot.lane.b32.xlu0 %v842, 32
        %v848 = vpop.permute.xlu0 %847
        %v849 = vsel %vm356, %v844, %v846
        %v850 = vsel %vm356, %v846, %v848
        %v854 = vadd.f32 %v829, %v844
        %v855 = vadd.f32 %v830, %v849
        %v856 = vadd.f32 %v831, %v850
        %v860 = vrot.slane %v854, 7
        %v861 = vrot.slane %v855, 7
        %v862 = vrot.slane %v856, 7
        %863 = vrot.lane.b32.xlu0 %v860, 50
        %v864 = vpop.permute.xlu0 %863
        %865 = vrot.lane.b32.xlu0 %v861, 50
        %v866 = vpop.permute.xlu0 %865
        %867 = vrot.lane.b32.xlu0 %v862, 50
        %v868 = vpop.permute.xlu0 %867
        %vm869 = vcmask 408576
        %v870 = vsel %vm869, %v864, %v866
        %v871 = vsel %vm869, %v866, %v868
        %v874 = vmul.f32 %v217, %v870
        %v875 = vmul.f32 %v218, %v871
        %v878 = vrot.slane %v874, 1
        %v879 = vrot.slane %v875, 1
        %v882 = vadd.f32 %v548, %v878
        %v883 = vadd.f32 %v549, %v879
        %s884 = sld [smem:[#allocation2 + $0x2]]
        %v885 = vstv %s884
        %v886 = vmul.f32 %v885, 0.0
        %v887 = vmul.f32 %v885, %v215
        %v888 = vmul.f32 %v885, %v216
        %v889 = vadd.f32 %v886, 0.0
        %v890 = vadd.f32 %v887, 0.0
        %v891 = vadd.f32 %v888, 0.0
        %s892 = sld [smem:[#allocation2 + $0x9]]
        %v893 = vstv %s892
        %v894 = vmul.f32 %v893, 0.0
        %v895 = vmul.f32 %v893, %v215
        %v896 = vmul.f32 %v893, %v216
        %900 = vrot.lane.b32.xlu0 %v894, 112
        %v901 = vpop.permute.xlu0 %900
        %902 = vrot.lane.b32.xlu0 %v895, 112
        %v903 = vpop.permute.xlu0 %902
        %904 = vrot.lane.b32.xlu0 %v896, 112
        %v905 = vpop.permute.xlu0 %904
        %v906 = vsel %vm241, %v901, %v903
        %v907 = vsel %vm241, %v903, %v905
        %v911 = vadd.f32 %v889, %v906
        %v912 = vadd.f32 %v890, %v907
        %v913 = vadd.f32 %v891, %v905
        %s914 = sld [smem:[#allocation2 + $0x10]]
        %v915 = vstv %s914
        %v916 = vmul.f32 %v915, 0.0
        %v917 = vmul.f32 %v915, %v215
        %v918 = vmul.f32 %v915, %v216
        %922 = vrot.lane.b32.xlu0 %v916, 96
        %v923 = vpop.permute.xlu0 %922
        %924 = vrot.lane.b32.xlu0 %v917, 96
        %v925 = vpop.permute.xlu0 %924
        %926 = vrot.lane.b32.xlu0 %v918, 96
        %v927 = vpop.permute.xlu0 %926
        %v928 = vsel %vm264, %v923, %v925
        %v929 = vsel %vm264, %v925, %v927
        %v933 = vadd.f32 %v911, %v928
        %v934 = vadd.f32 %v912, %v929
        %v935 = vadd.f32 %v913, %v927
        %s936 = sld [smem:[#allocation2 + $0x17]]
        %v937 = vstv %s936
        %v938 = vmul.f32 %v937, 0.0
        %v939 = vmul.f32 %v937, %v215
        %v940 = vmul.f32 %v937, %v216
        %944 = vrot.lane.b32.xlu0 %v938, 80
        %v945 = vpop.permute.xlu0 %944
        %946 = vrot.lane.b32.xlu0 %v939, 80
        %v947 = vpop.permute.xlu0 %946
        %948 = vrot.lane.b32.xlu0 %v940, 80
        %v949 = vpop.permute.xlu0 %948
        %v950 = vsel %vm287, %v945, %v947
        %v951 = vsel %vm287, %v947, %v949
        %v955 = vadd.f32 %v933, %v950
        %v956 = vadd.f32 %v934, %v951
        %v957 = vadd.f32 %v935, %v949
        %s958 = sld [smem:[#allocation2 + $0x1e]]
        %v959 = vstv %s958
        %v960 = vmul.f32 %v959, %v215
        %v961 = vmul.f32 %v959, %v216
        %v962 = vmul.f32 %v959, 0.0
        %966 = vrot.lane.b32.xlu0 %v960, 64
        %v967 = vpop.permute.xlu0 %966
        %968 = vrot.lane.b32.xlu0 %v961, 64
        %v969 = vpop.permute.xlu0 %968
        %970 = vrot.lane.b32.xlu0 %v962, 64
        %v971 = vpop.permute.xlu0 %970
        %v972 = vsel %vm310, %v967, %v969
        %v973 = vsel %vm310, %v969, %v971
        %v977 = vadd.f32 %v955, %v967
        %v978 = vadd.f32 %v956, %v972
        %v979 = vadd.f32 %v957, %v973
        %s980 = sld [smem:[#allocation2 + $0x25]]
        %v981 = vstv %s980
        %v982 = vmul.f32 %v981, %v215
        %v983 = vmul.f32 %v981, %v216
        %v984 = vmul.f32 %v981, 0.0
        %988 = vrot.lane.b32.xlu0 %v982, 48
        %v989 = vpop.permute.xlu0 %988
        %990 = vrot.lane.b32.xlu0 %v983, 48
        %v991 = vpop.permute.xlu0 %990
        %992 = vrot.lane.b32.xlu0 %v984, 48
        %v993 = vpop.permute.xlu0 %992
        %v994 = vsel %vm333, %v989, %v991
        %v995 = vsel %vm333, %v991, %v993
        %v999 = vadd.f32 %v977, %v989
        %v1000 = vadd.f32 %v978, %v994
        %v1001 = vadd.f32 %v979, %v995
        %s1002 = sld [smem:[#allocation2 + $0x2c]]
        %v1003 = vstv %s1002
        %v1004 = vmul.f32 %v1003, %v215
        %v1005 = vmul.f32 %v1003, %v216
        %v1006 = vmul.f32 %v1003, 0.0
        %1010 = vrot.lane.b32.xlu0 %v1004, 32
        %v1011 = vpop.permute.xlu0 %1010
        %1012 = vrot.lane.b32.xlu0 %v1005, 32
        %v1013 = vpop.permute.xlu0 %1012
        %1014 = vrot.lane.b32.xlu0 %v1006, 32
        %v1015 = vpop.permute.xlu0 %1014
        %v1016 = vsel %vm356, %v1011, %v1013
        %v1017 = vsel %vm356, %v1013, %v1015
        %v1021 = vadd.f32 %v999, %v1011
        %v1022 = vadd.f32 %v1000, %v1016
        %v1023 = vadd.f32 %v1001, %v1017
        %s1024 = sld [smem:[#allocation2 + $0x33]]
        %v1025 = vstv %s1024
        %v1026 = vmul.f32 %v1025, 0.0
        %v1027 = vmul.f32 %v1025, %v215
        %v1028 = vmul.f32 %v1025, %v216
        %v1032 = vrot.slane %v1026, 1
        %v1033 = vrot.slane %v1027, 1
        %v1034 = vrot.slane %v1028, 1
        %v1038 = vadd.f32 %v1021, %v1032
        %v1039 = vadd.f32 %v1022, %v1033
        %v1040 = vadd.f32 %v1023, %v1034
        %s1041 = sld [smem:[#allocation2 + $0x3a]]
        %v1042 = vstv %s1041
        %v1043 = vmul.f32 %v1042, 0.0
        %v1044 = vmul.f32 %v1042, %v215
        %v1045 = vmul.f32 %v1042, %v216
        %v1049 = vrot.slane %v1043, 1
        %v1050 = vrot.slane %v1044, 1
        %v1051 = vrot.slane %v1045, 1
        %1052 = vrot.lane.b32.xlu0 %v1049, 112
        %v1053 = vpop.permute.xlu0 %1052
        %1054 = vrot.lane.b32.xlu0 %v1050, 112
        %v1055 = vpop.permute.xlu0 %1054
        %1056 = vrot.lane.b32.xlu0 %v1051, 112
        %v1057 = vpop.permute.xlu0 %1056
        %v1058 = vsel %vm241, %v1053, %v1055
        %v1059 = vsel %vm241, %v1055, %v1057
        %v1063 = vadd.f32 %v1038, %v1058
        %v1064 = vadd.f32 %v1039, %v1059
        %v1065 = vadd.f32 %v1040, %v1057
        %s1066 = sld [smem:[#allocation2 + $0x41]]
        %v1067 = vstv %s1066
        %v1068 = vmul.f32 %v1067, 0.0
        %v1069 = vmul.f32 %v1067, %v215
        %v1070 = vmul.f32 %v1067, %v216
        %v1074 = vrot.slane %v1068, 1
        %v1075 = vrot.slane %v1069, 1
        %v1076 = vrot.slane %v1070, 1
        %1077 = vrot.lane.b32.xlu0 %v1074, 96
        %v1078 = vpop.permute.xlu0 %1077
        %1079 = vrot.lane.b32.xlu0 %v1075, 96
        %v1080 = vpop.permute.xlu0 %1079
        %1081 = vrot.lane.b32.xlu0 %v1076, 96
        %v1082 = vpop.permute.xlu0 %1081
        %v1083 = vsel %vm264, %v1078, %v1080
        %v1084 = vsel %vm264, %v1080, %v1082
        %v1088 = vadd.f32 %v1063, %v1083
        %v1089 = vadd.f32 %v1064, %v1084
        %v1090 = vadd.f32 %v1065, %v1082
        %s1091 = sld [smem:[#allocation2 + $0x48]]
        %v1092 = vstv %s1091
        %v1093 = vmul.f32 %v1092, 0.0
        %v1094 = vmul.f32 %v1092, %v215
        %v1095 = vmul.f32 %v1092, %v216
        %v1099 = vrot.slane %v1093, 1
        %v1100 = vrot.slane %v1094, 1
        %v1101 = vrot.slane %v1095, 1
        %1102 = vrot.lane.b32.xlu0 %v1099, 80
        %v1103 = vpop.permute.xlu0 %1102
        %1104 = vrot.lane.b32.xlu0 %v1100, 80
        %v1105 = vpop.permute.xlu0 %1104
        %1106 = vrot.lane.b32.xlu0 %v1101, 80
        %v1107 = vpop.permute.xlu0 %1106
        %v1108 = vsel %vm287, %v1103, %v1105
        %v1109 = vsel %vm287, %v1105, %v1107
        %v1113 = vadd.f32 %v1088, %v1108
        %v1114 = vadd.f32 %v1089, %v1109
        %v1115 = vadd.f32 %v1090, %v1107
        %s1116 = sld [smem:[#allocation2 + $0x4f]]
        %v1117 = vstv %s1116
        %v1118 = vmul.f32 %v1117, %v215
        %v1119 = vmul.f32 %v1117, %v216
        %v1120 = vmul.f32 %v1117, 0.0
        %v1124 = vrot.slane %v1118, 1
        %v1125 = vrot.slane %v1119, 1
        %v1126 = vrot.slane %v1120, 1
        %1127 = vrot.lane.b32.xlu0 %v1124, 64
        %v1128 = vpop.permute.xlu0 %1127
        %1129 = vrot.lane.b32.xlu0 %v1125, 64
        %v1130 = vpop.permute.xlu0 %1129
        %1131 = vrot.lane.b32.xlu0 %v1126, 64
        %v1132 = vpop.permute.xlu0 %1131
        %v1133 = vsel %vm310, %v1128, %v1130
        %v1134 = vsel %vm310, %v1130, %v1132
        %v1138 = vadd.f32 %v1113, %v1128
        %v1139 = vadd.f32 %v1114, %v1133
        %v1140 = vadd.f32 %v1115, %v1134
        %s1141 = sld [smem:[#allocation2 + $0x56]]
        %v1142 = vstv %s1141
        %v1143 = vmul.f32 %v1142, %v215
        %v1144 = vmul.f32 %v1142, %v216
        %v1145 = vmul.f32 %v1142, 0.0
        %v1149 = vrot.slane %v1143, 1
        %v1150 = vrot.slane %v1144, 1
        %v1151 = vrot.slane %v1145, 1
        %1152 = vrot.lane.b32.xlu0 %v1149, 48
        %v1153 = vpop.permute.xlu0 %1152
        %1154 = vrot.lane.b32.xlu0 %v1150, 48
        %v1155 = vpop.permute.xlu0 %1154
        %1156 = vrot.lane.b32.xlu0 %v1151, 48
        %v1157 = vpop.permute.xlu0 %1156
        %v1158 = vsel %vm333, %v1153, %v1155
        %v1159 = vsel %vm333, %v1155, %v1157
        %v1163 = vadd.f32 %v1138, %v1153
        %v1164 = vadd.f32 %v1139, %v1158
        %v1165 = vadd.f32 %v1140, %v1159
        %s1166 = sld [smem:[#allocation2 + $0x5d]]
        %v1167 = vstv %s1166
        %v1168 = vmul.f32 %v1167, %v215
        %v1169 = vmul.f32 %v1167, %v216
        %v1170 = vmul.f32 %v1167, 0.0
        %v1174 = vrot.slane %v1168, 1
        %v1175 = vrot.slane %v1169, 1
        %v1176 = vrot.slane %v1170, 1
        %1177 = vrot.lane.b32.xlu0 %v1174, 32
        %v1178 = vpop.permute.xlu0 %1177
        %1179 = vrot.lane.b32.xlu0 %v1175, 32
        %v1180 = vpop.permute.xlu0 %1179
        %1181 = vrot.lane.b32.xlu0 %v1176, 32
        %v1182 = vpop.permute.xlu0 %1181
        %v1183 = vsel %vm356, %v1178, %v1180
        %v1184 = vsel %vm356, %v1180, %v1182
        %v1188 = vadd.f32 %v1163, %v1178
        %v1189 = vadd.f32 %v1164, %v1183
        %v1190 = vadd.f32 %v1165, %v1184
        %v1194 = vrot.slane %v1188, 6
        %v1195 = vrot.slane %v1189, 6
        %v1196 = vrot.slane %v1190, 6
        %1197 = vrot.lane.b32.xlu0 %v1194, 49
        %v1198 = vpop.permute.xlu0 %1197
        %1199 = vrot.lane.b32.xlu0 %v1195, 49
        %v1200 = vpop.permute.xlu0 %1199
        %1201 = vrot.lane.b32.xlu0 %v1196, 49
        %v1202 = vpop.permute.xlu0 %1201
        %vm1203 = vcmask 400384
        %v1204 = vsel %vm1203, %v1198, %v1200
        %v1205 = vsel %vm1203, %v1200, %v1202
        %v1208 = vmul.f32 %v217, %v1204
        %v1209 = vmul.f32 %v218, %v1205
        %v1212 = vrot.slane %v1208, 2
        %v1213 = vrot.slane %v1209, 2
        %v1216 = vadd.f32 %v882, %v1212
        %v1217 = vadd.f32 %v883, %v1213
        %s1218 = sld [smem:[#allocation2 + $0x3]]
        %v1219 = vstv %s1218
        %v1220 = vmul.f32 %v1219, 0.0
        %v1221 = vmul.f32 %v1219, %v215
        %v1222 = vmul.f32 %v1219, %v216
        %v1223 = vadd.f32 %v1220, 0.0
        %v1224 = vadd.f32 %v1221, 0.0
        %v1225 = vadd.f32 %v1222, 0.0
        %s1226 = sld [smem:[#allocation2 + $0xa]]
        %v1227 = vstv %s1226
        %v1228 = vmul.f32 %v1227, 0.0
        %v1229 = vmul.f32 %v1227, %v215
        %v1230 = vmul.f32 %v1227, %v216
        %1234 = vrot.lane.b32.xlu0 %v1228, 112
        %v1235 = vpop.permute.xlu0 %1234
        %1236 = vrot.lane.b32.xlu0 %v1229, 112
        %v1237 = vpop.permute.xlu0 %1236
        %1238 = vrot.lane.b32.xlu0 %v1230, 112
        %v1239 = vpop.permute.xlu0 %1238
        %v1240 = vsel %vm241, %v1235, %v1237
        %v1241 = vsel %vm241, %v1237, %v1239
        %v1245 = vadd.f32 %v1223, %v1240
        %v1246 = vadd.f32 %v1224, %v1241
        %v1247 = vadd.f32 %v1225, %v1239
        %s1248 = sld [smem:[#allocation2 + $0x11]]
        %v1249 = vstv %s1248
        %v1250 = vmul.f32 %v1249, 0.0
        %v1251 = vmul.f32 %v1249, %v215
        %v1252 = vmul.f32 %v1249, %v216
        %1256 = vrot.lane.b32.xlu0 %v1250, 96
        %v1257 = vpop.permute.xlu0 %1256
        %1258 = vrot.lane.b32.xlu0 %v1251, 96
        %v1259 = vpop.permute.xlu0 %1258
        %1260 = vrot.lane.b32.xlu0 %v1252, 96
        %v1261 = vpop.permute.xlu0 %1260
        %v1262 = vsel %vm264, %v1257, %v1259
        %v1263 = vsel %vm264, %v1259, %v1261
        %v1267 = vadd.f32 %v1245, %v1262
        %v1268 = vadd.f32 %v1246, %v1263
        %v1269 = vadd.f32 %v1247, %v1261
        %s1270 = sld [smem:[#allocation2 + $0x18]]
        %v1271 = vstv %s1270
        %v1272 = vmul.f32 %v1271, %v215
        %v1273 = vmul.f32 %v1271, %v216
        %1276 = vrot.lane.b32.xlu0 %v1272, 80
        %v1277 = vpop.permute.xlu0 %1276
        %1278 = vrot.lane.b32.xlu0 %v1273, 80
        %v1279 = vpop.permute.xlu0 %1278
        %v1280 = vsel %vm287, %v1277, %v1279
        %v1284 = vadd.f32 %v1267, %v1277
        %v1285 = vadd.f32 %v1268, %v1280
        %v1286 = vadd.f32 %v1269, %v1279
        %s1287 = sld [smem:[#allocation2 + $0x1f]]
        %v1288 = vstv %s1287
        %v1289 = vmul.f32 %v1288, %v215
        %v1290 = vmul.f32 %v1288, %v216
        %v1291 = vmul.f32 %v1288, 0.0
        %1295 = vrot.lane.b32.xlu0 %v1289, 64
        %v1296 = vpop.permute.xlu0 %1295
        %1297 = vrot.lane.b32.xlu0 %v1290, 64
        %v1298 = vpop.permute.xlu0 %1297
        %1299 = vrot.lane.b32.xlu0 %v1291, 64
        %v1300 = vpop.permute.xlu0 %1299
        %v1301 = vsel %vm310, %v1296, %v1298
        %v1302 = vsel %vm310, %v1298, %v1300
        %v1306 = vadd.f32 %v1284, %v1296
        %v1307 = vadd.f32 %v1285, %v1301
        %v1308 = vadd.f32 %v1286, %v1302
        %s1309 = sld [smem:[#allocation2 + $0x26]]
        %v1310 = vstv %s1309
        %v1311 = vmul.f32 %v1310, %v215
        %v1312 = vmul.f32 %v1310, %v216
        %v1313 = vmul.f32 %v1310, 0.0
        %1317 = vrot.lane.b32.xlu0 %v1311, 48
        %v1318 = vpop.permute.xlu0 %1317
        %1319 = vrot.lane.b32.xlu0 %v1312, 48
        %v1320 = vpop.permute.xlu0 %1319
        %1321 = vrot.lane.b32.xlu0 %v1313, 48
        %v1322 = vpop.permute.xlu0 %1321
        %v1323 = vsel %vm333, %v1318, %v1320
        %v1324 = vsel %vm333, %v1320, %v1322
        %v1328 = vadd.f32 %v1306, %v1318
        %v1329 = vadd.f32 %v1307, %v1323
        %v1330 = vadd.f32 %v1308, %v1324
        %s1331 = sld [smem:[#allocation2 + $0x2d]]
        %v1332 = vstv %s1331
        %v1333 = vmul.f32 %v1332, %v215
        %v1334 = vmul.f32 %v1332, %v216
        %v1335 = vmul.f32 %v1332, 0.0
        %1339 = vrot.lane.b32.xlu0 %v1333, 32
        %v1340 = vpop.permute.xlu0 %1339
        %1341 = vrot.lane.b32.xlu0 %v1334, 32
        %v1342 = vpop.permute.xlu0 %1341
        %1343 = vrot.lane.b32.xlu0 %v1335, 32
        %v1344 = vpop.permute.xlu0 %1343
        %v1345 = vsel %vm356, %v1340, %v1342
        %v1346 = vsel %vm356, %v1342, %v1344
        %v1350 = vadd.f32 %v1328, %v1340
        %v1351 = vadd.f32 %v1329, %v1345
        %v1352 = vadd.f32 %v1330, %v1346
        %s1353 = sld [smem:[#allocation2 + $0x34]]
        %v1354 = vstv %s1353
        %v1355 = vmul.f32 %v1354, 0.0
        %v1356 = vmul.f32 %v1354, %v215
        %v1357 = vmul.f32 %v1354, %v216
        %v1361 = vrot.slane %v1355, 1
        %v1362 = vrot.slane %v1356, 1
        %v1363 = vrot.slane %v1357, 1
        %v1367 = vadd.f32 %v1350, %v1361
        %v1368 = vadd.f32 %v1351, %v1362
        %v1369 = vadd.f32 %v1352, %v1363
        %s1370 = sld [smem:[#allocation2 + $0x3b]]
        %v1371 = vstv %s1370
        %v1372 = vmul.f32 %v1371, 0.0
        %v1373 = vmul.f32 %v1371, %v215
        %v1374 = vmul.f32 %v1371, %v216
        %v1378 = vrot.slane %v1372, 1
        %v1379 = vrot.slane %v1373, 1
        %v1380 = vrot.slane %v1374, 1
        %1381 = vrot.lane.b32.xlu0 %v1378, 112
        %v1382 = vpop.permute.xlu0 %1381
        %1383 = vrot.lane.b32.xlu0 %v1379, 112
        %v1384 = vpop.permute.xlu0 %1383
        %1385 = vrot.lane.b32.xlu0 %v1380, 112
        %v1386 = vpop.permute.xlu0 %1385
        %v1387 = vsel %vm241, %v1382, %v1384
        %v1388 = vsel %vm241, %v1384, %v1386
        %v1392 = vadd.f32 %v1367, %v1387
        %v1393 = vadd.f32 %v1368, %v1388
        %v1394 = vadd.f32 %v1369, %v1386
        %s1395 = sld [smem:[#allocation2 + $0x42]]
        %v1396 = vstv %s1395
        %v1397 = vmul.f32 %v1396, 0.0
        %v1398 = vmul.f32 %v1396, %v215
        %v1399 = vmul.f32 %v1396, %v216
        %v1403 = vrot.slane %v1397, 1
        %v1404 = vrot.slane %v1398, 1
        %v1405 = vrot.slane %v1399, 1
        %1406 = vrot.lane.b32.xlu0 %v1403, 96
        %v1407 = vpop.permute.xlu0 %1406
        %1408 = vrot.lane.b32.xlu0 %v1404, 96
        %v1409 = vpop.permute.xlu0 %1408
        %1410 = vrot.lane.b32.xlu0 %v1405, 96
        %v1411 = vpop.permute.xlu0 %1410
        %v1412 = vsel %vm264, %v1407, %v1409
        %v1413 = vsel %vm264, %v1409, %v1411
        %v1417 = vadd.f32 %v1392, %v1412
        %v1418 = vadd.f32 %v1393, %v1413
        %v1419 = vadd.f32 %v1394, %v1411
        %s1420 = sld [smem:[#allocation2 + $0x49]]
        %v1421 = vstv %s1420
        %v1422 = vmul.f32 %v1421, %v215
        %v1423 = vmul.f32 %v1421, %v216
        %v1426 = vrot.slane %v1422, 1
        %v1427 = vrot.slane %v1423, 1
        %1428 = vrot.lane.b32.xlu0 %v1426, 80
        %v1429 = vpop.permute.xlu0 %1428
        %1430 = vrot.lane.b32.xlu0 %v1427, 80
        %v1431 = vpop.permute.xlu0 %1430
        %v1432 = vsel %vm287, %v1429, %v1431
        %v1436 = vadd.f32 %v1417, %v1429
        %v1437 = vadd.f32 %v1418, %v1432
        %v1438 = vadd.f32 %v1419, %v1431
        %s1439 = sld [smem:[#allocation2 + $0x50]]
        %v1440 = vstv %s1439
        %v1441 = vmul.f32 %v1440, %v215
        %v1442 = vmul.f32 %v1440, %v216
        %v1443 = vmul.f32 %v1440, 0.0
        %v1447 = vrot.slane %v1441, 1
        %v1448 = vrot.slane %v1442, 1
        %v1449 = vrot.slane %v1443, 1
        %1450 = vrot.lane.b32.xlu0 %v1447, 64
        %v1451 = vpop.permute.xlu0 %1450
        %1452 = vrot.lane.b32.xlu0 %v1448, 64
        %v1453 = vpop.permute.xlu0 %1452
        %1454 = vrot.lane.b32.xlu0 %v1449, 64
        %v1455 = vpop.permute.xlu0 %1454
        %v1456 = vsel %vm310, %v1451, %v1453
        %v1457 = vsel %vm310, %v1453, %v1455
        %v1461 = vadd.f32 %v1436, %v1451
        %v1462 = vadd.f32 %v1437, %v1456
        %v1463 = vadd.f32 %v1438, %v1457
        %s1464 = sld [smem:[#allocation2 + $0x57]]
        %v1465 = vstv %s1464
        %v1466 = vmul.f32 %v1465, %v215
        %v1467 = vmul.f32 %v1465, %v216
        %v1468 = vmul.f32 %v1465, 0.0
        %v1472 = vrot.slane %v1466, 1
        %v1473 = vrot.slane %v1467, 1
        %v1474 = vrot.slane %v1468, 1
        %1475 = vrot.lane.b32.xlu0 %v1472, 48
        %v1476 = vpop.permute.xlu0 %1475
        %1477 = vrot.lane.b32.xlu0 %v1473, 48
        %v1478 = vpop.permute.xlu0 %1477
        %1479 = vrot.lane.b32.xlu0 %v1474, 48
        %v1480 = vpop.permute.xlu0 %1479
        %v1481 = vsel %vm333, %v1476, %v1478
        %v1482 = vsel %vm333, %v1478, %v1480
        %v1486 = vadd.f32 %v1461, %v1476
        %v1487 = vadd.f32 %v1462, %v1481
        %v1488 = vadd.f32 %v1463, %v1482
        %s1489 = sld [smem:[#allocation2 + $0x5e]]
        %v1490 = vstv %s1489
        %v1491 = vmul.f32 %v1490, %v215
        %v1492 = vmul.f32 %v1490, %v216
        %v1493 = vmul.f32 %v1490, 0.0
        %v1497 = vrot.slane %v1491, 1
        %v1498 = vrot.slane %v1492, 1
        %v1499 = vrot.slane %v1493, 1
        %1500 = vrot.lane.b32.xlu0 %v1497, 32
        %v1501 = vpop.permute.xlu0 %1500
        %1502 = vrot.lane.b32.xlu0 %v1498, 32
        %v1503 = vpop.permute.xlu0 %1502
        %1504 = vrot.lane.b32.xlu0 %v1499, 32
        %v1505 = vpop.permute.xlu0 %1504
        %v1506 = vsel %vm356, %v1501, %v1503
        %v1507 = vsel %vm356, %v1503, %v1505
        %v1511 = vadd.f32 %v1486, %v1501
        %v1512 = vadd.f32 %v1487, %v1506
        %v1513 = vadd.f32 %v1488, %v1507
        %v1517 = vrot.slane %v1511, 5
        %v1518 = vrot.slane %v1512, 5
        %v1519 = vrot.slane %v1513, 5
        %1520 = vrot.lane.b32.xlu0 %v1517, 48
        %v1521 = vpop.permute.xlu0 %1520
        %1522 = vrot.lane.b32.xlu0 %v1518, 48
        %v1523 = vpop.permute.xlu0 %1522
        %1524 = vrot.lane.b32.xlu0 %v1519, 48
        %v1525 = vpop.permute.xlu0 %1524
        %v1526 = vsel %vm333, %v1521, %v1523
        %v1527 = vsel %vm333, %v1523, %v1525
        %v1530 = vmul.f32 %v217, %v1526
        %v1531 = vmul.f32 %v218, %v1527
        %v1534 = vrot.slane %v1530, 3
        %v1535 = vrot.slane %v1531, 3
        %v1538 = vadd.f32 %v1216, %v1534
        %v1539 = vadd.f32 %v1217, %v1535
        %s1540 = sld [smem:[#allocation2 + $0x4]]
        %v1541 = vstv %s1540
        %v1542 = vmul.f32 %v1541, 0.0
        %v1543 = vmul.f32 %v1541, %v215
        %v1544 = vmul.f32 %v1541, %v216
        %v1545 = vadd.f32 %v1542, 0.0
        %v1546 = vadd.f32 %v1543, 0.0
        %v1547 = vadd.f32 %v1544, 0.0
        %s1548 = sld [smem:[#allocation2 + $0xb]]
        %v1549 = vstv %s1548
        %v1550 = vmul.f32 %v1549, 0.0
        %v1551 = vmul.f32 %v1549, %v215
        %v1552 = vmul.f32 %v1549, %v216
        %1556 = vrot.lane.b32.xlu0 %v1550, 112
        %v1557 = vpop.permute.xlu0 %1556
        %1558 = vrot.lane.b32.xlu0 %v1551, 112
        %v1559 = vpop.permute.xlu0 %1558
        %1560 = vrot.lane.b32.xlu0 %v1552, 112
        %v1561 = vpop.permute.xlu0 %1560
        %v1562 = vsel %vm241, %v1557, %v1559
        %v1563 = vsel %vm241, %v1559, %v1561
        %v1567 = vadd.f32 %v1545, %v1562
        %v1568 = vadd.f32 %v1546, %v1563
        %v1569 = vadd.f32 %v1547, %v1561
        %s1570 = sld [smem:[#allocation2 + $0x12]]
        %v1571 = vstv %s1570
        %v1572 = vmul.f32 %v1571, 0.0
        %v1573 = vmul.f32 %v1571, %v215
        %v1574 = vmul.f32 %v1571, %v216
        %1578 = vrot.lane.b32.xlu0 %v1572, 96
        %v1579 = vpop.permute.xlu0 %1578
        %1580 = vrot.lane.b32.xlu0 %v1573, 96
        %v1581 = vpop.permute.xlu0 %1580
        %1582 = vrot.lane.b32.xlu0 %v1574, 96
        %v1583 = vpop.permute.xlu0 %1582
        %v1584 = vsel %vm264, %v1579, %v1581
        %v1585 = vsel %vm264, %v1581, %v1583
        %v1589 = vadd.f32 %v1567, %v1584
        %v1590 = vadd.f32 %v1568, %v1585
        %v1591 = vadd.f32 %v1569, %v1583
        %s1592 = sld [smem:[#allocation2 + $0x19]]
        %v1593 = vstv %s1592
        %v1594 = vmul.f32 %v1593, %v215
        %v1595 = vmul.f32 %v1593, %v216
        %v1596 = vmul.f32 %v1593, 0.0
        %1600 = vrot.lane.b32.xlu0 %v1594, 80
        %v1601 = vpop.permute.xlu0 %1600
        %1602 = vrot.lane.b32.xlu0 %v1595, 80
        %v1603 = vpop.permute.xlu0 %1602
        %1604 = vrot.lane.b32.xlu0 %v1596, 80
        %v1605 = vpop.permute.xlu0 %1604
        %v1606 = vsel %vm287, %v1601, %v1603
        %v1607 = vsel %vm287, %v1603, %v1605
        %v1611 = vadd.f32 %v1589, %v1601
        %v1612 = vadd.f32 %v1590, %v1606
        %v1613 = vadd.f32 %v1591, %v1607
        %s1614 = sld [smem:[#allocation2 + $0x20]]
        %v1615 = vstv %s1614
        %v1616 = vmul.f32 %v1615, %v215
        %v1617 = vmul.f32 %v1615, %v216
        %v1618 = vmul.f32 %v1615, 0.0
        %1622 = vrot.lane.b32.xlu0 %v1616, 64
        %v1623 = vpop.permute.xlu0 %1622
        %1624 = vrot.lane.b32.xlu0 %v1617, 64
        %v1625 = vpop.permute.xlu0 %1624
        %1626 = vrot.lane.b32.xlu0 %v1618, 64
        %v1627 = vpop.permute.xlu0 %1626
        %v1628 = vsel %vm310, %v1623, %v1625
        %v1629 = vsel %vm310, %v1625, %v1627
        %v1633 = vadd.f32 %v1611, %v1623
        %v1634 = vadd.f32 %v1612, %v1628
        %v1635 = vadd.f32 %v1613, %v1629
        %s1636 = sld [smem:[#allocation2 + $0x27]]
        %v1637 = vstv %s1636
        %v1638 = vmul.f32 %v1637, %v215
        %v1639 = vmul.f32 %v1637, %v216
        %v1640 = vmul.f32 %v1637, 0.0
        %1644 = vrot.lane.b32.xlu0 %v1638, 48
        %v1645 = vpop.permute.xlu0 %1644
        %1646 = vrot.lane.b32.xlu0 %v1639, 48
        %v1647 = vpop.permute.xlu0 %1646
        %1648 = vrot.lane.b32.xlu0 %v1640, 48
        %v1649 = vpop.permute.xlu0 %1648
        %v1650 = vsel %vm333, %v1645, %v1647
        %v1651 = vsel %vm333, %v1647, %v1649
        %v1655 = vadd.f32 %v1633, %v1645
        %v1656 = vadd.f32 %v1634, %v1650
        %v1657 = vadd.f32 %v1635, %v1651
        %s1658 = sld [smem:[#allocation2 + $0x2e]]
        %v1659 = vstv %s1658
        %v1660 = vmul.f32 %v1659, %v215
        %v1661 = vmul.f32 %v1659, %v216
        %v1662 = vmul.f32 %v1659, 0.0
        %1666 = vrot.lane.b32.xlu0 %v1660, 32
        %v1667 = vpop.permute.xlu0 %1666
        %1668 = vrot.lane.b32.xlu0 %v1661, 32
        %v1669 = vpop.permute.xlu0 %1668
        %1670 = vrot.lane.b32.xlu0 %v1662, 32
        %v1671 = vpop.permute.xlu0 %1670
        %v1672 = vsel %vm356, %v1667, %v1669
        %v1673 = vsel %vm356, %v1669, %v1671
        %v1677 = vadd.f32 %v1655, %v1667
        %v1678 = vadd.f32 %v1656, %v1672
        %v1679 = vadd.f32 %v1657, %v1673
        %s1680 = sld [smem:[#allocation2 + $0x35]]
        %v1681 = vstv %s1680
        %v1682 = vmul.f32 %v1681, 0.0
        %v1683 = vmul.f32 %v1681, %v215
        %v1684 = vmul.f32 %v1681, %v216
        %v1688 = vrot.slane %v1682, 1
        %v1689 = vrot.slane %v1683, 1
        %v1690 = vrot.slane %v1684, 1
        %v1694 = vadd.f32 %v1677, %v1688
        %v1695 = vadd.f32 %v1678, %v1689
        %v1696 = vadd.f32 %v1679, %v1690
        %s1697 = sld [smem:[#allocation2 + $0x3c]]
        %v1698 = vstv %s1697
        %v1699 = vmul.f32 %v1698, 0.0
        %v1700 = vmul.f32 %v1698, %v215
        %v1701 = vmul.f32 %v1698, %v216
        %v1705 = vrot.slane %v1699, 1
        %v1706 = vrot.slane %v1700, 1
        %v1707 = vrot.slane %v1701, 1
        %1708 = vrot.lane.b32.xlu0 %v1705, 112
        %v1709 = vpop.permute.xlu0 %1708
        %1710 = vrot.lane.b32.xlu0 %v1706, 112
        %v1711 = vpop.permute.xlu0 %1710
        %1712 = vrot.lane.b32.xlu0 %v1707, 112
        %v1713 = vpop.permute.xlu0 %1712
        %v1714 = vsel %vm241, %v1709, %v1711
        %v1715 = vsel %vm241, %v1711, %v1713
        %v1719 = vadd.f32 %v1694, %v1714
        %v1720 = vadd.f32 %v1695, %v1715
        %v1721 = vadd.f32 %v1696, %v1713
        %s1722 = sld [smem:[#allocation2 + $0x43]]
        %v1723 = vstv %s1722
        %v1724 = vmul.f32 %v1723, 0.0
        %v1725 = vmul.f32 %v1723, %v215
        %v1726 = vmul.f32 %v1723, %v216
        %v1730 = vrot.slane %v1724, 1
        %v1731 = vrot.slane %v1725, 1
        %v1732 = vrot.slane %v1726, 1
        %1733 = vrot.lane.b32.xlu0 %v1730, 96
        %v1734 = vpop.permute.xlu0 %1733
        %1735 = vrot.lane.b32.xlu0 %v1731, 96
        %v1736 = vpop.permute.xlu0 %1735
        %1737 = vrot.lane.b32.xlu0 %v1732, 96
        %v1738 = vpop.permute.xlu0 %1737
        %v1739 = vsel %vm264, %v1734, %v1736
        %v1740 = vsel %vm264, %v1736, %v1738
        %v1744 = vadd.f32 %v1719, %v1739
        %v1745 = vadd.f32 %v1720, %v1740
        %v1746 = vadd.f32 %v1721, %v1738
        %s1747 = sld [smem:[#allocation2 + $0x4a]]
        %v1748 = vstv %s1747
        %v1749 = vmul.f32 %v1748, %v215
        %v1750 = vmul.f32 %v1748, %v216
        %v1751 = vmul.f32 %v1748, 0.0
        %v1755 = vrot.slane %v1749, 1
        %v1756 = vrot.slane %v1750, 1
        %v1757 = vrot.slane %v1751, 1
        %1758 = vrot.lane.b32.xlu0 %v1755, 80
        %v1759 = vpop.permute.xlu0 %1758
        %1760 = vrot.lane.b32.xlu0 %v1756, 80
        %v1761 = vpop.permute.xlu0 %1760
        %1762 = vrot.lane.b32.xlu0 %v1757, 80
        %v1763 = vpop.permute.xlu0 %1762
        %v1764 = vsel %vm287, %v1759, %v1761
        %v1765 = vsel %vm287, %v1761, %v1763
        %v1769 = vadd.f32 %v1744, %v1759
        %v1770 = vadd.f32 %v1745, %v1764
        %v1771 = vadd.f32 %v1746, %v1765
        %s1772 = sld [smem:[#allocation2 + $0x51]]
        %v1773 = vstv %s1772
        %v1774 = vmul.f32 %v1773, %v215
        %v1775 = vmul.f32 %v1773, %v216
        %v1776 = vmul.f32 %v1773, 0.0
        %v1780 = vrot.slane %v1774, 1
        %v1781 = vrot.slane %v1775, 1
        %v1782 = vrot.slane %v1776, 1
        %1783 = vrot.lane.b32.xlu0 %v1780, 64
        %v1784 = vpop.permute.xlu0 %1783
        %1785 = vrot.lane.b32.xlu0 %v1781, 64
        %v1786 = vpop.permute.xlu0 %1785
        %1787 = vrot.lane.b32.xlu0 %v1782, 64
        %v1788 = vpop.permute.xlu0 %1787
        %v1789 = vsel %vm310, %v1784, %v1786
        %v1790 = vsel %vm310, %v1786, %v1788
        %v1794 = vadd.f32 %v1769, %v1784
        %v1795 = vadd.f32 %v1770, %v1789
        %v1796 = vadd.f32 %v1771, %v1790
        %s1797 = sld [smem:[#allocation2 + $0x58]]
        %v1798 = vstv %s1797
        %v1799 = vmul.f32 %v1798, %v215
        %v1800 = vmul.f32 %v1798, %v216
        %v1801 = vmul.f32 %v1798, 0.0
        %v1805 = vrot.slane %v1799, 1
        %v1806 = vrot.slane %v1800, 1
        %v1807 = vrot.slane %v1801, 1
        %1808 = vrot.lane.b32.xlu0 %v1805, 48
        %v1809 = vpop.permute.xlu0 %1808
        %1810 = vrot.lane.b32.xlu0 %v1806, 48
        %v1811 = vpop.permute.xlu0 %1810
        %1812 = vrot.lane.b32.xlu0 %v1807, 48
        %v1813 = vpop.permute.xlu0 %1812
        %v1814 = vsel %vm333, %v1809, %v1811
        %v1815 = vsel %vm333, %v1811, %v1813
        %v1819 = vadd.f32 %v1794, %v1809
        %v1820 = vadd.f32 %v1795, %v1814
        %v1821 = vadd.f32 %v1796, %v1815
        %s1822 = sld [smem:[#allocation2 + $0x5f]]
        %v1823 = vstv %s1822
        %v1824 = vmul.f32 %v1823, %v215
        %v1825 = vmul.f32 %v1823, %v216
        %v1826 = vmul.f32 %v1823, 0.0
        %v1830 = vrot.slane %v1824, 1
        %v1831 = vrot.slane %v1825, 1
        %v1832 = vrot.slane %v1826, 1
        %1833 = vrot.lane.b32.xlu0 %v1830, 32
        %v1834 = vpop.permute.xlu0 %1833
        %1835 = vrot.lane.b32.xlu0 %v1831, 32
        %v1836 = vpop.permute.xlu0 %1835
        %1837 = vrot.lane.b32.xlu0 %v1832, 32
        %v1838 = vpop.permute.xlu0 %1837
        %v1839 = vsel %vm356, %v1834, %v1836
        %v1840 = vsel %vm356, %v1836, %v1838
        %v1844 = vadd.f32 %v1819, %v1834
        %v1845 = vadd.f32 %v1820, %v1839
        %v1846 = vadd.f32 %v1821, %v1840
        %v1850 = vrot.slane %v1844, 4
        %v1851 = vrot.slane %v1845, 4
        %v1852 = vrot.slane %v1846, 4
        %1853 = vrot.lane.b32.xlu0 %v1850, 47
        %v1854 = vpop.permute.xlu0 %1853
        %1855 = vrot.lane.b32.xlu0 %v1851, 47
        %v1856 = vpop.permute.xlu0 %1855
        %1857 = vrot.lane.b32.xlu0 %v1852, 47
        %v1858 = vpop.permute.xlu0 %1857
        %vm1859 = vcmask 384000
        %v1860 = vsel %vm1859, %v1854, %v1856
        %v1861 = vsel %vm1859, %v1856, %v1858
        %v1864 = vmul.f32 %v217, %v1860
        %v1865 = vmul.f32 %v218, %v1861
        %v1868 = vrot.slane %v1864, 4
        %v1869 = vrot.slane %v1865, 4
        %v1872 = vadd.f32 %v1538, %v1868
        %v1873 = vadd.f32 %v1539, %v1869
        %s1874 = sld [smem:[#allocation2 + $0x5]]
        %v1875 = vstv %s1874
        %v1876 = vmul.f32 %v1875, 0.0
        %v1877 = vmul.f32 %v1875, %v215
        %v1878 = vmul.f32 %v1875, %v216
        %v1879 = vadd.f32 %v1876, 0.0
        %v1880 = vadd.f32 %v1877, 0.0
        %v1881 = vadd.f32 %v1878, 0.0
        %s1882 = sld [smem:[#allocation2 + $0xc]]
        %v1883 = vstv %s1882
        %v1884 = vmul.f32 %v1883, 0.0
        %v1885 = vmul.f32 %v1883, %v215
        %v1886 = vmul.f32 %v1883, %v216
        %1890 = vrot.lane.b32.xlu0 %v1884, 112
        %v1891 = vpop.permute.xlu0 %1890
        %1892 = vrot.lane.b32.xlu0 %v1885, 112
        %v1893 = vpop.permute.xlu0 %1892
        %1894 = vrot.lane.b32.xlu0 %v1886, 112
        %v1895 = vpop.permute.xlu0 %1894
        %v1896 = vsel %vm241, %v1891, %v1893
        %v1897 = vsel %vm241, %v1893, %v1895
        %v1901 = vadd.f32 %v1879, %v1896
        %v1902 = vadd.f32 %v1880, %v1897
        %v1903 = vadd.f32 %v1881, %v1895
        %s1904 = sld [smem:[#allocation2 + $0x13]]
        %v1905 = vstv %s1904
        %v1906 = vmul.f32 %v1905, 0.0
        %v1907 = vmul.f32 %v1905, %v215
        %v1908 = vmul.f32 %v1905, %v216
        %1912 = vrot.lane.b32.xlu0 %v1906, 96
        %v1913 = vpop.permute.xlu0 %1912
        %1914 = vrot.lane.b32.xlu0 %v1907, 96
        %v1915 = vpop.permute.xlu0 %1914
        %1916 = vrot.lane.b32.xlu0 %v1908, 96
        %v1917 = vpop.permute.xlu0 %1916
        %v1918 = vsel %vm264, %v1913, %v1915
        %v1919 = vsel %vm264, %v1915, %v1917
        %v1923 = vadd.f32 %v1901, %v1918
        %v1924 = vadd.f32 %v1902, %v1919
        %v1925 = vadd.f32 %v1903, %v1917
        %s1926 = sld [smem:[#allocation2 + $0x1a]]
        %v1927 = vstv %s1926
        %v1928 = vmul.f32 %v1927, %v215
        %v1929 = vmul.f32 %v1927, %v216
        %v1930 = vmul.f32 %v1927, 0.0
        %1934 = vrot.lane.b32.xlu0 %v1928, 80
        %v1935 = vpop.permute.xlu0 %1934
        %1936 = vrot.lane.b32.xlu0 %v1929, 80
        %v1937 = vpop.permute.xlu0 %1936
        %1938 = vrot.lane.b32.xlu0 %v1930, 80
        %v1939 = vpop.permute.xlu0 %1938
        %v1940 = vsel %vm287, %v1935, %v1937
        %v1941 = vsel %vm287, %v1937, %v1939
        %v1945 = vadd.f32 %v1923, %v1935
        %v1946 = vadd.f32 %v1924, %v1940
        %v1947 = vadd.f32 %v1925, %v1941
        %s1948 = sld [smem:[#allocation2 + $0x21]]
        %v1949 = vstv %s1948
        %v1950 = vmul.f32 %v1949, %v215
        %v1951 = vmul.f32 %v1949, %v216
        %v1952 = vmul.f32 %v1949, 0.0
        %1956 = vrot.lane.b32.xlu0 %v1950, 64
        %v1957 = vpop.permute.xlu0 %1956
        %1958 = vrot.lane.b32.xlu0 %v1951, 64
        %v1959 = vpop.permute.xlu0 %1958
        %1960 = vrot.lane.b32.xlu0 %v1952, 64
        %v1961 = vpop.permute.xlu0 %1960
        %v1962 = vsel %vm310, %v1957, %v1959
        %v1963 = vsel %vm310, %v1959, %v1961
        %v1967 = vadd.f32 %v1945, %v1957
        %v1968 = vadd.f32 %v1946, %v1962
        %v1969 = vadd.f32 %v1947, %v1963
        %s1970 = sld [smem:[#allocation2 + $0x28]]
        %v1971 = vstv %s1970
        %v1972 = vmul.f32 %v1971, %v215
        %v1973 = vmul.f32 %v1971, %v216
        %v1974 = vmul.f32 %v1971, 0.0
        %1978 = vrot.lane.b32.xlu0 %v1972, 48
        %v1979 = vpop.permute.xlu0 %1978
        %1980 = vrot.lane.b32.xlu0 %v1973, 48
        %v1981 = vpop.permute.xlu0 %1980
        %1982 = vrot.lane.b32.xlu0 %v1974, 48
        %v1983 = vpop.permute.xlu0 %1982
        %v1984 = vsel %vm333, %v1979, %v1981
        %v1985 = vsel %vm333, %v1981, %v1983
        %v1989 = vadd.f32 %v1967, %v1979
        %v1990 = vadd.f32 %v1968, %v1984
        %v1991 = vadd.f32 %v1969, %v1985
        %s1992 = sld [smem:[#allocation2 + $0x2f]]
        %v1993 = vstv %s1992
        %v1994 = vmul.f32 %v1993, %v215
        %v1995 = vmul.f32 %v1993, %v216
        %v1996 = vmul.f32 %v1993, 0.0
        %2000 = vrot.lane.b32.xlu0 %v1994, 32
        %v2001 = vpop.permute.xlu0 %2000
        %2002 = vrot.lane.b32.xlu0 %v1995, 32
        %v2003 = vpop.permute.xlu0 %2002
        %2004 = vrot.lane.b32.xlu0 %v1996, 32
        %v2005 = vpop.permute.xlu0 %2004
        %v2006 = vsel %vm356, %v2001, %v2003
        %v2007 = vsel %vm356, %v2003, %v2005
        %v2011 = vadd.f32 %v1989, %v2001
        %v2012 = vadd.f32 %v1990, %v2006
        %v2013 = vadd.f32 %v1991, %v2007
        %s2014 = sld [smem:[#allocation2 + $0x36]]
        %v2015 = vstv %s2014
        %v2016 = vmul.f32 %v2015, 0.0
        %v2017 = vmul.f32 %v2015, %v215
        %v2018 = vmul.f32 %v2015, %v216
        %v2022 = vrot.slane %v2016, 1
        %v2023 = vrot.slane %v2017, 1
        %v2024 = vrot.slane %v2018, 1
        %v2028 = vadd.f32 %v2011, %v2022
        %v2029 = vadd.f32 %v2012, %v2023
        %v2030 = vadd.f32 %v2013, %v2024
        %s2031 = sld [smem:[#allocation2 + $0x3d]]
        %v2032 = vstv %s2031
        %v2033 = vmul.f32 %v2032, 0.0
        %v2034 = vmul.f32 %v2032, %v215
        %v2035 = vmul.f32 %v2032, %v216
        %v2039 = vrot.slane %v2033, 1
        %v2040 = vrot.slane %v2034, 1
        %v2041 = vrot.slane %v2035, 1
        %2042 = vrot.lane.b32.xlu0 %v2039, 112
        %v2043 = vpop.permute.xlu0 %2042
        %2044 = vrot.lane.b32.xlu0 %v2040, 112
        %v2045 = vpop.permute.xlu0 %2044
        %2046 = vrot.lane.b32.xlu0 %v2041, 112
        %v2047 = vpop.permute.xlu0 %2046
        %v2048 = vsel %vm241, %v2043, %v2045
        %v2049 = vsel %vm241, %v2045, %v2047
        %v2053 = vadd.f32 %v2028, %v2048
        %v2054 = vadd.f32 %v2029, %v2049
        %v2055 = vadd.f32 %v2030, %v2047
        %s2056 = sld [smem:[#allocation2 + $0x44]]
        %v2057 = vstv %s2056
        %v2058 = vmul.f32 %v2057, 0.0
        %v2059 = vmul.f32 %v2057, %v215
        %v2060 = vmul.f32 %v2057, %v216
        %v2064 = vrot.slane %v2058, 1
        %v2065 = vrot.slane %v2059, 1
        %v2066 = vrot.slane %v2060, 1
        %2067 = vrot.lane.b32.xlu0 %v2064, 96
        %v2068 = vpop.permute.xlu0 %2067
        %2069 = vrot.lane.b32.xlu0 %v2065, 96
        %v2070 = vpop.permute.xlu0 %2069
        %2071 = vrot.lane.b32.xlu0 %v2066, 96
        %v2072 = vpop.permute.xlu0 %2071
        %v2073 = vsel %vm264, %v2068, %v2070
        %v2074 = vsel %vm264, %v2070, %v2072
        %v2078 = vadd.f32 %v2053, %v2073
        %v2079 = vadd.f32 %v2054, %v2074
        %v2080 = vadd.f32 %v2055, %v2072
        %s2081 = sld [smem:[#allocation2 + $0x4b]]
        %v2082 = vstv %s2081
        %v2083 = vmul.f32 %v2082, %v215
        %v2084 = vmul.f32 %v2082, %v216
        %v2085 = vmul.f32 %v2082, 0.0
        %v2089 = vrot.slane %v2083, 1
        %v2090 = vrot.slane %v2084, 1
        %v2091 = vrot.slane %v2085, 1
        %2092 = vrot.lane.b32.xlu0 %v2089, 80
        %v2093 = vpop.permute.xlu0 %2092
        %2094 = vrot.lane.b32.xlu0 %v2090, 80
        %v2095 = vpop.permute.xlu0 %2094
        %2096 = vrot.lane.b32.xlu0 %v2091, 80
        %v2097 = vpop.permute.xlu0 %2096
        %v2098 = vsel %vm287, %v2093, %v2095
        %v2099 = vsel %vm287, %v2095, %v2097
        %v2103 = vadd.f32 %v2078, %v2093
        %v2104 = vadd.f32 %v2079, %v2098
        %v2105 = vadd.f32 %v2080, %v2099
        %s2106 = sld [smem:[#allocation2 + $0x52]]
        %v2107 = vstv %s2106
        %v2108 = vmul.f32 %v2107, %v215
        %v2109 = vmul.f32 %v2107, %v216
        %v2110 = vmul.f32 %v2107, 0.0
        %v2114 = vrot.slane %v2108, 1
        %v2115 = vrot.slane %v2109, 1
        %v2116 = vrot.slane %v2110, 1
        %2117 = vrot.lane.b32.xlu0 %v2114, 64
        %v2118 = vpop.permute.xlu0 %2117
        %2119 = vrot.lane.b32.xlu0 %v2115, 64
        %v2120 = vpop.permute.xlu0 %2119
        %2121 = vrot.lane.b32.xlu0 %v2116, 64
        %v2122 = vpop.permute.xlu0 %2121
        %v2123 = vsel %vm310, %v2118, %v2120
        %v2124 = vsel %vm310, %v2120, %v2122
        %v2128 = vadd.f32 %v2103, %v2118
        %v2129 = vadd.f32 %v2104, %v2123
        %v2130 = vadd.f32 %v2105, %v2124
        %s2131 = sld [smem:[#allocation2 + $0x59]]
        %v2132 = vstv %s2131
        %v2133 = vmul.f32 %v2132, %v215
        %v2134 = vmul.f32 %v2132, %v216
        %v2135 = vmul.f32 %v2132, 0.0
        %v2139 = vrot.slane %v2133, 1
        %v2140 = vrot.slane %v2134, 1
        %v2141 = vrot.slane %v2135, 1
        %2142 = vrot.lane.b32.xlu0 %v2139, 48
        %v2143 = vpop.permute.xlu0 %2142
        %2144 = vrot.lane.b32.xlu0 %v2140, 48
        %v2145 = vpop.permute.xlu0 %2144
        %2146 = vrot.lane.b32.xlu0 %v2141, 48
        %v2147 = vpop.permute.xlu0 %2146
        %v2148 = vsel %vm333, %v2143, %v2145
        %v2149 = vsel %vm333, %v2145, %v2147
        %v2153 = vadd.f32 %v2128, %v2143
        %v2154 = vadd.f32 %v2129, %v2148
        %v2155 = vadd.f32 %v2130, %v2149
        %s2156 = sld [smem:[#allocation2 + $0x60]]
        %v2157 = vstv %s2156
        %v2158 = vmul.f32 %v2157, %v215
        %v2159 = vmul.f32 %v2157, %v216
        %v2160 = vmul.f32 %v2157, 0.0
        %v2164 = vrot.slane %v2158, 1
        %v2165 = vrot.slane %v2159, 1
        %v2166 = vrot.slane %v2160, 1
        %2167 = vrot.lane.b32.xlu0 %v2164, 32
        %v2168 = vpop.permute.xlu0 %2167
        %2169 = vrot.lane.b32.xlu0 %v2165, 32
        %v2170 = vpop.permute.xlu0 %2169
        %2171 = vrot.lane.b32.xlu0 %v2166, 32
        %v2172 = vpop.permute.xlu0 %2171
        %v2173 = vsel %vm356, %v2168, %v2170
        %v2174 = vsel %vm356, %v2170, %v2172
        %v2178 = vadd.f32 %v2153, %v2168
        %v2179 = vadd.f32 %v2154, %v2173
        %v2180 = vadd.f32 %v2155, %v2174
        %v2184 = vrot.slane %v2178, 3
        %v2185 = vrot.slane %v2179, 3
        %v2186 = vrot.slane %v2180, 3
        %2187 = vrot.lane.b32.xlu0 %v2184, 46
        %v2188 = vpop.permute.xlu0 %2187
        %2189 = vrot.lane.b32.xlu0 %v2185, 46
        %v2190 = vpop.permute.xlu0 %2189
        %2191 = vrot.lane.b32.xlu0 %v2186, 46
        %v2192 = vpop.permute.xlu0 %2191
        %vm2193 = vcmask 375808
        %v2194 = vsel %vm2193, %v2188, %v2190
        %v2195 = vsel %vm2193, %v2190, %v2192
        %v2198 = vmul.f32 %v217, %v2194
        %v2199 = vmul.f32 %v218, %v2195
        %v2202 = vrot.slane %v2198, 5
        %v2203 = vrot.slane %v2199, 5
        %v2206 = vadd.f32 %v1872, %v2202
        %v2207 = vadd.f32 %v1873, %v2203
        %s2208 = sld [smem:[#allocation2 + $0x6]]
        %v2209 = vstv %s2208
        %v2210 = vmul.f32 %v2209, 0.0
        %v2211 = vmul.f32 %v2209, %v215
        %v2212 = vmul.f32 %v2209, %v216
        %v2213 = vadd.f32 %v2210, 0.0
        %v2214 = vadd.f32 %v2211, 0.0
        %v2215 = vadd.f32 %v2212, 0.0
        %s2216 = sld [smem:[#allocation2 + $0xd]]
        %v2217 = vstv %s2216
        %v2218 = vmul.f32 %v2217, 0.0
        %v2219 = vmul.f32 %v2217, %v215
        %v2220 = vmul.f32 %v2217, %v216
        %2224 = vrot.lane.b32.xlu0 %v2218, 112
        %v2225 = vpop.permute.xlu0 %2224
        %2226 = vrot.lane.b32.xlu0 %v2219, 112
        %v2227 = vpop.permute.xlu0 %2226
        %2228 = vrot.lane.b32.xlu0 %v2220, 112
        %v2229 = vpop.permute.xlu0 %2228
        %v2230 = vsel %vm241, %v2225, %v2227
        %v2231 = vsel %vm241, %v2227, %v2229
        %v2235 = vadd.f32 %v2213, %v2230
        %v2236 = vadd.f32 %v2214, %v2231
        %v2237 = vadd.f32 %v2215, %v2229
        %s2238 = sld [smem:[#allocation2 + $0x14]]
        %v2239 = vstv %s2238
        %v2240 = vmul.f32 %v2239, 0.0
        %v2241 = vmul.f32 %v2239, %v215
        %v2242 = vmul.f32 %v2239, %v216
        %2246 = vrot.lane.b32.xlu0 %v2240, 96
        %v2247 = vpop.permute.xlu0 %2246
        %2248 = vrot.lane.b32.xlu0 %v2241, 96
        %v2249 = vpop.permute.xlu0 %2248
        %2250 = vrot.lane.b32.xlu0 %v2242, 96
        %v2251 = vpop.permute.xlu0 %2250
        %v2252 = vsel %vm264, %v2247, %v2249
        %v2253 = vsel %vm264, %v2249, %v2251
        %v2257 = vadd.f32 %v2235, %v2252
        %v2258 = vadd.f32 %v2236, %v2253
        %v2259 = vadd.f32 %v2237, %v2251
        %s2260 = sld [smem:[#allocation2 + $0x1b]]
        %v2261 = vstv %s2260
        %v2262 = vmul.f32 %v2261, %v215
        %v2263 = vmul.f32 %v2261, %v216
        %v2264 = vmul.f32 %v2261, 0.0
        %2268 = vrot.lane.b32.xlu0 %v2262, 80
        %v2269 = vpop.permute.xlu0 %2268
        %2270 = vrot.lane.b32.xlu0 %v2263, 80
        %v2271 = vpop.permute.xlu0 %2270
        %2272 = vrot.lane.b32.xlu0 %v2264, 80
        %v2273 = vpop.permute.xlu0 %2272
        %v2274 = vsel %vm287, %v2269, %v2271
        %v2275 = vsel %vm287, %v2271, %v2273
        %v2279 = vadd.f32 %v2257, %v2269
        %v2280 = vadd.f32 %v2258, %v2274
        %v2281 = vadd.f32 %v2259, %v2275
        %s2282 = sld [smem:[#allocation2 + $0x22]]
        %v2283 = vstv %s2282
        %v2284 = vmul.f32 %v2283, %v215
        %v2285 = vmul.f32 %v2283, %v216
        %v2286 = vmul.f32 %v2283, 0.0
        %2290 = vrot.lane.b32.xlu0 %v2284, 64
        %v2291 = vpop.permute.xlu0 %2290
        %2292 = vrot.lane.b32.xlu0 %v2285, 64
        %v2293 = vpop.permute.xlu0 %2292
        %2294 = vrot.lane.b32.xlu0 %v2286, 64
        %v2295 = vpop.permute.xlu0 %2294
        %v2296 = vsel %vm310, %v2291, %v2293
        %v2297 = vsel %vm310, %v2293, %v2295
        %v2301 = vadd.f32 %v2279, %v2291
        %v2302 = vadd.f32 %v2280, %v2296
        %v2303 = vadd.f32 %v2281, %v2297
        %s2304 = sld [smem:[#allocation2 + $0x29]]
        %v2305 = vstv %s2304
        %v2306 = vmul.f32 %v2305, %v215
        %v2307 = vmul.f32 %v2305, %v216
        %v2308 = vmul.f32 %v2305, 0.0
        %2312 = vrot.lane.b32.xlu0 %v2306, 48
        %v2313 = vpop.permute.xlu0 %2312
        %2314 = vrot.lane.b32.xlu0 %v2307, 48
        %v2315 = vpop.permute.xlu0 %2314
        %2316 = vrot.lane.b32.xlu0 %v2308, 48
        %v2317 = vpop.permute.xlu0 %2316
        %v2318 = vsel %vm333, %v2313, %v2315
        %v2319 = vsel %vm333, %v2315, %v2317
        %v2323 = vadd.f32 %v2301, %v2313
        %v2324 = vadd.f32 %v2302, %v2318
        %v2325 = vadd.f32 %v2303, %v2319
        %s2326 = sld [smem:[#allocation2 + $0x30]]
        %v2327 = vstv %s2326
        %v2328 = vmul.f32 %v2327, %v215
        %v2329 = vmul.f32 %v2327, %v216
        %v2330 = vmul.f32 %v2327, 0.0
        %2334 = vrot.lane.b32.xlu0 %v2328, 32
        %v2335 = vpop.permute.xlu0 %2334
        %2336 = vrot.lane.b32.xlu0 %v2329, 32
        %v2337 = vpop.permute.xlu0 %2336
        %2338 = vrot.lane.b32.xlu0 %v2330, 32
        %v2339 = vpop.permute.xlu0 %2338
        %v2340 = vsel %vm356, %v2335, %v2337
        %v2341 = vsel %vm356, %v2337, %v2339
        %v2345 = vadd.f32 %v2323, %v2335
        %v2346 = vadd.f32 %v2324, %v2340
        %v2347 = vadd.f32 %v2325, %v2341
        %s2348 = sld [smem:[#allocation2 + $0x37]]
        %v2349 = vstv %s2348
        %v2350 = vmul.f32 %v2349, 0.0
        %v2351 = vmul.f32 %v2349, %v215
        %v2352 = vmul.f32 %v2349, %v216
        %v2356 = vrot.slane %v2350, 1
        %v2357 = vrot.slane %v2351, 1
        %v2358 = vrot.slane %v2352, 1
        %v2362 = vadd.f32 %v2345, %v2356
        %v2363 = vadd.f32 %v2346, %v2357
        %v2364 = vadd.f32 %v2347, %v2358
        %s2365 = sld [smem:[#allocation2 + $0x3e]]
        %v2366 = vstv %s2365
        %v2367 = vmul.f32 %v2366, 0.0
        %v2368 = vmul.f32 %v2366, %v215
        %v2369 = vmul.f32 %v2366, %v216
        %v2373 = vrot.slane %v2367, 1
        %v2374 = vrot.slane %v2368, 1
        %v2375 = vrot.slane %v2369, 1
        %2376 = vrot.lane.b32.xlu0 %v2373, 112
        %v2377 = vpop.permute.xlu0 %2376
        %2378 = vrot.lane.b32.xlu0 %v2374, 112
        %v2379 = vpop.permute.xlu0 %2378
        %2380 = vrot.lane.b32.xlu0 %v2375, 112
        %v2381 = vpop.permute.xlu0 %2380
        %v2382 = vsel %vm241, %v2377, %v2379
        %v2383 = vsel %vm241, %v2379, %v2381
        %v2387 = vadd.f32 %v2362, %v2382
        %v2388 = vadd.f32 %v2363, %v2383
        %v2389 = vadd.f32 %v2364, %v2381
        %s2390 = sld [smem:[#allocation2 + $0x45]]
        %v2391 = vstv %s2390
        %v2392 = vmul.f32 %v2391, 0.0
        %v2393 = vmul.f32 %v2391, %v215
        %v2394 = vmul.f32 %v2391, %v216
        %v2398 = vrot.slane %v2392, 1
        %v2399 = vrot.slane %v2393, 1
        %v2400 = vrot.slane %v2394, 1
        %2401 = vrot.lane.b32.xlu0 %v2398, 96
        %v2402 = vpop.permute.xlu0 %2401
        %2403 = vrot.lane.b32.xlu0 %v2399, 96
        %v2404 = vpop.permute.xlu0 %2403
        %2405 = vrot.lane.b32.xlu0 %v2400, 96
        %v2406 = vpop.permute.xlu0 %2405
        %v2407 = vsel %vm264, %v2402, %v2404
        %v2408 = vsel %vm264, %v2404, %v2406
        %v2412 = vadd.f32 %v2387, %v2407
        %v2413 = vadd.f32 %v2388, %v2408
        %v2414 = vadd.f32 %v2389, %v2406
        %s2415 = sld [smem:[#allocation2 + $0x4c]]
        %v2416 = vstv %s2415
        %v2417 = vmul.f32 %v2416, %v215
        %v2418 = vmul.f32 %v2416, %v216
        %v2419 = vmul.f32 %v2416, 0.0
        %v2423 = vrot.slane %v2417, 1
        %v2424 = vrot.slane %v2418, 1
        %v2425 = vrot.slane %v2419, 1
        %2426 = vrot.lane.b32.xlu0 %v2423, 80
        %v2427 = vpop.permute.xlu0 %2426
        %2428 = vrot.lane.b32.xlu0 %v2424, 80
        %v2429 = vpop.permute.xlu0 %2428
        %2430 = vrot.lane.b32.xlu0 %v2425, 80
        %v2431 = vpop.permute.xlu0 %2430
        %v2432 = vsel %vm287, %v2427, %v2429
        %v2433 = vsel %vm287, %v2429, %v2431
        %v2437 = vadd.f32 %v2412, %v2427
        %v2438 = vadd.f32 %v2413, %v2432
        %v2439 = vadd.f32 %v2414, %v2433
        %s2440 = sld [smem:[#allocation2 + $0x53]]
        %v2441 = vstv %s2440
        %v2442 = vmul.f32 %v2441, %v215
        %v2443 = vmul.f32 %v2441, %v216
        %v2444 = vmul.f32 %v2441, 0.0
        %v2448 = vrot.slane %v2442, 1
        %v2449 = vrot.slane %v2443, 1
        %v2450 = vrot.slane %v2444, 1
        %2451 = vrot.lane.b32.xlu0 %v2448, 64
        %v2452 = vpop.permute.xlu0 %2451
        %2453 = vrot.lane.b32.xlu0 %v2449, 64
        %v2454 = vpop.permute.xlu0 %2453
        %2455 = vrot.lane.b32.xlu0 %v2450, 64
        %v2456 = vpop.permute.xlu0 %2455
        %v2457 = vsel %vm310, %v2452, %v2454
        %v2458 = vsel %vm310, %v2454, %v2456
        %v2462 = vadd.f32 %v2437, %v2452
        %v2463 = vadd.f32 %v2438, %v2457
        %v2464 = vadd.f32 %v2439, %v2458
        %s2465 = sld [smem:[#allocation2 + $0x5a]]
        %v2466 = vstv %s2465
        %v2467 = vmul.f32 %v2466, %v215
        %v2468 = vmul.f32 %v2466, %v216
        %v2469 = vmul.f32 %v2466, 0.0
        %v2473 = vrot.slane %v2467, 1
        %v2474 = vrot.slane %v2468, 1
        %v2475 = vrot.slane %v2469, 1
        %2476 = vrot.lane.b32.xlu0 %v2473, 48
        %v2477 = vpop.permute.xlu0 %2476
        %2478 = vrot.lane.b32.xlu0 %v2474, 48
        %v2479 = vpop.permute.xlu0 %2478
        %2480 = vrot.lane.b32.xlu0 %v2475, 48
        %v2481 = vpop.permute.xlu0 %2480
        %v2482 = vsel %vm333, %v2477, %v2479
        %v2483 = vsel %vm333, %v2479, %v2481
        %v2487 = vadd.f32 %v2462, %v2477
        %v2488 = vadd.f32 %v2463, %v2482
        %v2489 = vadd.f32 %v2464, %v2483
        %s2490 = sld [smem:[#allocation2 + $0x61]]
        %v2491 = vstv %s2490
        %v2492 = vmul.f32 %v2491, %v215
        %v2493 = vmul.f32 %v2491, %v216
        %v2494 = vmul.f32 %v2491, 0.0
        %v2498 = vrot.slane %v2492, 1
        %v2499 = vrot.slane %v2493, 1
        %v2500 = vrot.slane %v2494, 1
        %2501 = vrot.lane.b32.xlu0 %v2498, 32
        %v2502 = vpop.permute.xlu0 %2501
        %2503 = vrot.lane.b32.xlu0 %v2499, 32
        %v2504 = vpop.permute.xlu0 %2503
        %2505 = vrot.lane.b32.xlu0 %v2500, 32
        %v2506 = vpop.permute.xlu0 %2505
        %v2507 = vsel %vm356, %v2502, %v2504
        %v2508 = vsel %vm356, %v2504, %v2506
        %v2512 = vadd.f32 %v2487, %v2502
        %v2513 = vadd.f32 %v2488, %v2507
        %v2514 = vadd.f32 %v2489, %v2508
        %v2518 = vrot.slane %v2512, 2
        %v2519 = vrot.slane %v2513, 2
        %v2520 = vrot.slane %v2514, 2
        %2521 = vrot.lane.b32.xlu0 %v2518, 45
        %v2522 = vpop.permute.xlu0 %2521
        %2523 = vrot.lane.b32.xlu0 %v2519, 45
        %v2524 = vpop.permute.xlu0 %2523
        %2525 = vrot.lane.b32.xlu0 %v2520, 45
        %v2526 = vpop.permute.xlu0 %2525
        %vm2527 = vcmask 367616
        %v2528 = vsel %vm2527, %v2522, %v2524
        %v2529 = vsel %vm2527, %v2524, %v2526
        %v2532 = vmul.f32 %v217, %v2528
        %v2533 = vmul.f32 %v218, %v2529
        %v2536 = vrot.slane %v2532, 6
        %v2537 = vrot.slane %v2533, 6
        %v2540 = vadd.f32 %v2206, %v2536
        %v2541 = vadd.f32 %v2207, %v2537
        %v2542 = vsub.f32 0.0, %v2540
        %v2543 = vsub.f32 0.0, %v2541
        %v2544 = vmul.f32 %v2542, 1.442695
        %v2545 = vpow.pop %v2544
        %v2546 = vmul.f32 %v2543, 1.442695
        %v2547 = vpow.pop %v2546
        %v2548 = vadd.f32 %v2545, 1.0
        %v2549 = vadd.f32 %v2547, 1.0
        %v2550 = vrcp.pop %v2548
        %v2551 = vmul.f32 1.0, %v2550
        %v2552 = vrcp.pop %v2549
        %v2553 = vmul.f32 1.0, %v2552
        %v2554 = vlaneseq
        %v2555 = vshrl.u32 %v2554, 7
        %v2556 = vsub.s32 0, %v2555
        %v2557 = vrot.slane %v2551, %v2556
        %v2558 = vlaneseq
        %v2559 = vshrl.u32 %v2558, 7
        %v2560 = vsub.s32 0, %v2559
        %v2561 = vrot.slane %v2553, %v2560
        %v2562 = vmul.f32 %v185, %v2557
        %v2563 = vmul.f32 %v186, %v2561
        %2564 = vst [vmem:[%s184] sm:$0xff] %v2562
        %2565 = vst [vmem:[%s184 + $0x8] sm:$0xff] %v2563
        %p2566 = scmp.lt.s32.totalorder %s15, 1
        %s2567 = scalar_select %p2566, %s15, 1
        %s2568 = smul.addr %s2567, 2
        %s2569 = smul.addr %s2568, 8
        %s2570 = scalar_lea.vmem %s3, %s2569
        // Predicated region
        $region37: #{spatial_attention_forward.1} parent=31 // pred_check
          %p2571 = pneg %p101
        $region38: #{spatial_attention_forward.1} parent=31 // pred_check_branch
          %2573 = sbr.rel (%p2571) target = $region40
        $region39: #{spatial_attention_forward.1} parent=31 // pred_region
          _
        $region40: #{spatial_attention_forward.1} parent=31 // pred_fallthru
          _
      $region32: #{spatial_attention_forward.1} parent=5 // pred_fallthru
        _
      %p2574 = scmp.le.s32.totalorder 2, %s10
      // Predicated region
      $region41: #{spatial_attention_forward.1} parent=5 // pred_check
        %p2575 = pneg %p2574
      $region42: #{spatial_attention_forward.1} parent=5 // pred_check_branch
        %2577 = sbr.rel (%p2575) target = $region44
      $region43: #{spatial_attention_forward.1} parent=5 // pred_region
        %s2578 = ssub.s32 %s10, 2
        // Predicated region
        $region45: #{spatial_attention_forward.1} parent=43 // pred_check
          %p2579 = pneg %p107
        $region46: #{spatial_attention_forward.1} parent=43 // pred_check_branch
          %2581 = sbr.rel (%p2579) target = $region48
        $region47: #{spatial_attention_forward.1} parent=43 // pred_region
          %p2582 = scmp.lt.s32.totalorder %s16, 1
          %s2583 = scalar_select %p2582, %s16, 1
          %s2584 = smul.addr %s2583, 2
          %s2585 = smul.addr %s2584, 8
          %s2586 = scalar_lea.vmem %s3, %s2585
        $region48: #{spatial_attention_forward.1} parent=43 // pred_fallthru
          _
      $region44: #{spatial_attention_forward.1} parent=5 // pred_fallthru
        _
    $region6: #{spatial_attention_forward.1} parent=1 // loop_footer
      %s14 = sadd.s32 1, %s10
    $region7: #{spatial_attention_forward.1} parent=1 // loop_footer_branch
      %9 = sbr.rel target = $region3
    $region8: #{spatial_attention_forward.1} parent=1 // loop_exit
      _
    %2587 = vsyncpa [#allocation3], 1
    %s2588 = scalar_lea.sflag [#allocation3], 1
    %2589 = vsyncpa %s2588, 1

</llo_original>
